<compile_context>
chip_gen: v7x
topology: tpu7x:2x2x1
jax: 0.10.0
libtpu: 0.0.40
codegen_flags: <defaults>
</compile_context>

<pallas_src>
import functools

import jax
import jax.numpy as jnp
from jax import lax
from jax.experimental import pallas as pl
from jax.experimental.pallas import tpu as pltpu


# --------------------------------------------------------------------------
# SAB Pallas kernel
# --------------------------------------------------------------------------

def _gelu_exact(x):
    # PyTorch nn.GELU() default is the exact erf-based formulation.
    return 0.5 * x * (1.0 + lax.erf(x * 0.7071067811865476))


def _sab_kernel(x_ref, wf_ref, bf_ref, w3b_ref, b3b_ref, w2t_ref, b2_ref,
                wr_ref, br_ref, o_ref, *, cout, cmid, k):
    """Fused SAB forward on a (tile, k*Cin) row block (k pixels per row)."""
    kcout = k * cout
    x = x_ref[...]

    # Fused first 1x1 convs: [conv3 | conv1] as one matmul, one GELU pass.
    g = jnp.dot(x, wf_ref[...], preferred_element_type=jnp.float32) + bf_ref[...]
    g = _gelu_exact(g)
    h = g[:, :kcout]            # k bands of Cout  (main branch, post-GELU)
    a = g[:, kcout:]            # k bands of Cmid  (attention branch, post-GELU)

    # Main branch: second conv3 (shared weights), K = N = k*Cout on the MXU.
    out = jnp.dot(h, w3b_ref[...], preferred_element_type=jnp.float32) + b3b_ref[...]

    # Attention branch: conv2 (Cmid -> 1) per packed pixel, sigmoid, restore.
    t = a * w2t_ref[...]
    att = []
    for j in range(k):          # k is a small static int; unrolled at trace time
        s = jnp.sum(t[:, j * cmid:(j + 1) * cmid], axis=-1, keepdims=True)
        s = jax.nn.sigmoid(s + b2_ref[...])
        att.append(s * wr_ref[...] + br_ref[...])          # restore: 1 -> Cout
    r = att[0] if k == 1 else jnp.concatenate(att, axis=1)

    o_ref[...] = (r * out).astype(o_ref.dtype)


def _pick_row_tile(prows, bytes_per_row, *, max_tile=2048, min_steps=4,
                   vmem_budget=16 * 1024 * 1024):
    """Row tile: as big as the VMEM budget allows, >=4 grid steps when large."""
    tile = max(8, min(max_tile, vmem_budget // max(bytes_per_row, 1)))
    if prows > min_steps * 256:
        tile = min(tile, max(256, prows // min_steps))
    tile = min(tile, max(8, prows))
    return max(8, (tile // 8) * 8)


def sab_pallas_rows(x_rows, p, *, max_tile=2048):
    """SAB forward on a flat (pixels, Cin) array using the Pallas kernel."""
    rows, cin = x_rows.shape
    cout = p["w3"].shape[1]
    cmid = p["w1"].shape[1]

    # Lane-packing factor: fold k consecutive pixels into the lane axis so the
    # output block width is a multiple of 128 lanes.
    if cout < 128 and 128 % cout == 0 and rows % (128 // cout) == 0:
        k = 128 // cout
    else:
        k = 1
    kcin, kcout, kcmid = k * cin, k * cout, k * cmid
    prows = rows // k

    # Packed (block-diagonal / tiled) weights, built once per call (tiny).
    eye = jnp.eye(k, dtype=p["w3"].dtype)
    w3b = jnp.kron(eye, p["w3"])                                  # (kCin, kCout)
    wf = jnp.concatenate([w3b, jnp.kron(eye, p["w1"])], axis=1)   # (kCin, kCout+kCmid)
    bf = jnp.concatenate([jnp.tile(p["b3"], (1, k)),
                          jnp.tile(p["b1"], (1, k))], axis=1)     # (1, kCout+kCmid)
    b3b = jnp.tile(p["b3"], (1, k))                               # (1, kCout)
    w2t = jnp.tile(p["w2"], (1, k))                               # (1, kCmid)

    x_packed = x_rows.reshape(prows, kcin)   # free row-major view, no transpose

    bytes_per_row = 4 * (2 * kcin + 6 * kcout + 2 * kcmid)
    tile = _pick_row_tile(prows, bytes_per_row, max_tile=max_tile)
    nsteps = pl.cdiv(prows, tile)

    full = lambda i: (0, 0)
    out = pl.pallas_call(
        functools.partial(_sab_kernel, cout=cout, cmid=cmid, k=k),
        out_shape=jax.ShapeDtypeStruct((nsteps * tile, kcout), x_rows.dtype),
        grid_spec=pltpu.PrefetchScalarGridSpec(
            num_scalar_prefetch=0,
            grid=(nsteps,),
            in_specs=[
                pl.BlockSpec((tile, kcin), lambda i: (i, 0)),
                pl.BlockSpec(wf.shape, full),
                pl.BlockSpec(bf.shape, full),
                pl.BlockSpec(w3b.shape, full),
                pl.BlockSpec(b3b.shape, full),
                pl.BlockSpec(w2t.shape, full),
                pl.BlockSpec(p["b2"].shape, full),
                pl.BlockSpec(p["wr"].shape, full),
                pl.BlockSpec(p["br"].shape, full),
            ],
            out_specs=pl.BlockSpec((tile, kcout), lambda i: (i, 0)),
        ),
        compiler_params=pltpu.CompilerParams(
            dimension_semantics=("parallel",),
            vmem_limit_bytes=32 * 1024 * 1024),
    )(x_packed, wf, bf, w3b, b3b, w2t, p["b2"], p["wr"], p["br"])

    # Row-major unpack of the lane-packed output (free view; the slice is a
    # no-op whenever tile divides the packed row count).
    return out[:prows].reshape(rows, cout)


def sab_pallas_nhwc(x_nhwc, p):
    n, h, w, c = x_nhwc.shape
    cout = p["w3"].shape[1]
    y = sab_pallas_rows(x_nhwc.reshape(n * h * w, c), p)
    return y.reshape(n, h, w, cout)


def sab_reference_nhwc(x_nhwc, p):
    """Pure-JAX SAB reference (unpacked math) for validation."""
    n, h, w, c = x_nhwc.shape
    x = x_nhwc.reshape(n * h * w, c).astype(jnp.float32)
    hm = _gelu_exact(x @ p["w3"] + p["b3"])
    out = hm @ p["w3"] + p["b3"]
    a = _gelu_exact(x @ p["w1"] + p["b1"])
    s = jax.nn.sigmoid(jnp.sum(a * p["w2"], axis=-1, keepdims=True) + p["b2"])
    r = s * p["wr"] + p["br"]
    y = (r * out).astype(x_nhwc.dtype)
    return y.reshape(n, h, w, p["w3"].shape[1])


# --------------------------------------------------------------------------
# Rest of the Student network (NHWC, plain XLA ops)
# --------------------------------------------------------------------------
# TODO(synk): the 3x3 convolutions, ReLU and bilinear 2x upsampling stay on XLA
# (lax.conv_general_dilated / jax.image.resize); only the SAB blocks (pure 1x1
# convs) are fused into the Pallas kernel.

def _conv3x3(x, wb, stride=1):
    w, b = wb
    y = lax.conv_general_dilated(
        x, w, window_strides=(stride, stride), padding=((1, 1), (1, 1)),
        dimension_numbers=("NHWC", "HWIO", "NHWC"))
    return y + b


def _upsample2x(x):
    n, h, w, c = x.shape
    return jax.image.resize(x, (n, 2 * h, 2 * w, c), method="bilinear")


def student_forward(params, hazy_nchw, *, sab_fn):
    x = jnp.transpose(hazy_nchw, (0, 2, 3, 1))          # NCHW -> NHWC (once)
    # downsample
    x = jax.nn.relu(_conv3x3(x, params["down1"], stride=2))
    x = jax.nn.relu(_conv3x3(x, params["down2"], stride=2))
    # residual-in-residual blocks (each: 3x SAB -> conv3x3 -> +residual)
    for rir in params["rir"]:
        res = x
        for sab_p in rir["sabs"]:
            x = sab_fn(x, sab_p)
        x = _conv3x3(x, rir["conv"])
        x = x + res
    # upsample
    x = jax.nn.relu(_conv3x3(x, params["up1"]))
    x = _upsample2x(x)
    x = jax.nn.relu(_conv3x3(x, params["up2"]))
    x = _upsample2x(x)
    # reconstruction
    x = jnp.tanh(_conv3x3(x, params["recon"]))
    return jnp.transpose(x, (0, 3, 1, 2))                # NHWC -> NCHW (once)


# --------------------------------------------------------------------------
# Deterministic parameter init (PyTorch-like uniform fan-in init)
# --------------------------------------------------------------------------

def _uniform(key, shape, bound):
    return jax.random.uniform(key, shape, jnp.float32, -bound, bound)


def _conv3x3_init(key, cin, cout):
    kw, kb = jax.random.split(key)
    bound = 1.0 / (9.0 * cin) ** 0.5
    return (_uniform(kw, (3, 3, cin, cout), bound), _uniform(kb, (cout,), bound))


def _sab_init(key, cin, cout):
    cmid = cout // 16
    ks = jax.random.split(key, 8)
    b_in, b_mid = 1.0 / cin ** 0.5, 1.0 / cmid ** 0.5
    return {
        "w3": _uniform(ks[0], (cin, cout), b_in),
        "b3": _uniform(ks[1], (1, cout), b_in),
        "w1": _uniform(ks[2], (cin, cmid), b_in),
        "b1": _uniform(ks[3], (1, cmid), b_in),
        "w2": _uniform(ks[4], (1, cmid), b_mid),   # conv2: Cmid -> 1
        "b2": _uniform(ks[5], (1, 1), b_mid),
        "wr": _uniform(ks[6], (1, cout), 1.0),     # restore: 1 -> Cout
        "br": _uniform(ks[7], (1, cout), 1.0),
    }


def init_student_params(key, input_channels=3, inner_channels=32,
                        block_count=2, sab_per_block=3):
    n_keys = 2 + block_count * (sab_per_block + 1) + 3
    keys = list(jax.random.split(key, n_keys))
    idx = [0]

    def nxt():
        k = keys[idx[0]]
        idx[0] += 1
        return k

    params = {
        "down1": _conv3x3_init(nxt(), input_channels, inner_channels),
        "down2": _conv3x3_init(nxt(), inner_channels, inner_channels),
        "rir": [],
    }
    for _ in range(block_count):
        sabs = [_sab_init(nxt(), inner_channels, inner_channels)
                for _ in range(sab_per_block)]
        conv = _conv3x3_init(nxt(), inner_channels, inner_channels)
        params["rir"].append({"sabs": sabs, "conv": conv})
    params["up1"] = _conv3x3_init(nxt(), inner_channels, inner_channels)
    params["up2"] = _conv3x3_init(nxt(), inner_channels, inner_channels)
    params["recon"] = _conv3x3_init(nxt(), inner_channels, input_channels)
    return params


# --------------------------------------------------------------------------
# Demo / validation
# --------------------------------------------------------------------------

if __name__ == "__main__":
    key = jax.random.PRNGKey(0)
    kp, kx, ks = jax.random.split(key, 3)

    input_channels, inner_channels, block_count = 3, 32, 2
    N, H, W = 2, 16, 16

    params = init_student_params(kp, input_channels, inner_channels, block_count)
    hazy = jax.random.normal(kx, (N, input_channels, H, W), jnp.float32)

    # 1) Standalone SAB block: Pallas kernel vs pure-JAX reference.
    sab_p = params["rir"][0]["sabs"][0]
    x_sab = jax.random.normal(ks, (N, H, W, inner_channels), jnp.float32)
    y_sab = jax.block_until_ready(jax.jit(sab_pallas_nhwc)(x_sab, sab_p))
    y_sab_ref = sab_reference_nhwc(x_sab, sab_p)
    sab_err = float(jnp.max(jnp.abs(y_sab - y_sab_ref)))
    assert y_sab.shape == y_sab_ref.shape, (y_sab.shape, y_sab_ref.shape)
    assert sab_err < 1e-3, sab_err

    # 2) Full Student forward: Pallas-SAB network vs reference-SAB network.
    student_pallas = jax.jit(functools.partial(student_forward,
                                               sab_fn=sab_pallas_nhwc))
    student_ref = jax.jit(functools.partial(student_forward,
                                            sab_fn=sab_reference_nhwc))
    y = jax.block_until_ready(student_pallas(params, hazy))
    y_ref = jax.block_until_ready(student_ref(params, hazy))
    assert y.shape == (N, input_channels, H, W), y.shape
    full_err = float(jnp.max(jnp.abs(y - y_ref)))
    assert full_err < 2e-3, full_err

    print("KERNEL_OK")
</pallas_src>

<mosaic_0001>
module attributes {stable_mosaic.version = 11 : i64} {
  func.func @_sab_kernel(%arg0: i32, %arg1: memref<128x128xf32, #tpu.memory_space<vmem>>, %arg2: memref<128x136xf32, #tpu.memory_space<vmem>>, %arg3: memref<1x136xf32, #tpu.memory_space<vmem>>, %arg4: memref<128x128xf32, #tpu.memory_space<vmem>>, %arg5: memref<1x128xf32, #tpu.memory_space<vmem>>, %arg6: memref<1x8xf32, #tpu.memory_space<vmem>>, %arg7: memref<1x1xf32, #tpu.memory_space<vmem>>, %arg8: memref<1x32xf32, #tpu.memory_space<vmem>>, %arg9: memref<1x32xf32, #tpu.memory_space<vmem>>, %arg10: memref<128x128xf32, #tpu.memory_space<vmem>>) attributes {dimension_semantics = [#tpu.dimension_semantics<parallel>], iteration_bounds = array<i64: 1>, scalar_prefetch = 0 : i64, scratch_operands = 0 : i64, tpu.core_type = #tpu.core_type<tc>, window_params = [{transform_indices = @transform_0, window_bounds = array<i64: 128, 128>}, {pipeline_mode = #tpu.pipeline_mode<synchronous>, transform_indices = @transform_1, window_bounds = array<i64: 128, 136>}, {pipeline_mode = #tpu.pipeline_mode<synchronous>, transform_indices = @transform_2, window_bounds = array<i64: 1, 136>}, {pipeline_mode = #tpu.pipeline_mode<synchronous>, transform_indices = @transform_3, window_bounds = array<i64: 128, 128>}, {pipeline_mode = #tpu.pipeline_mode<synchronous>, transform_indices = @transform_4, window_bounds = array<i64: 1, 128>}, {pipeline_mode = #tpu.pipeline_mode<synchronous>, transform_indices = @transform_5, window_bounds = array<i64: 1, 8>}, {pipeline_mode = #tpu.pipeline_mode<synchronous>, transform_indices = @transform_6, window_bounds = array<i64: 1, 1>}, {pipeline_mode = #tpu.pipeline_mode<synchronous>, transform_indices = @transform_7, window_bounds = array<i64: 1, 32>}, {pipeline_mode = #tpu.pipeline_mode<synchronous>, transform_indices = @transform_8, window_bounds = array<i64: 1, 32>}, {transform_indices = @transform_9, window_bounds = array<i64: 128, 128>}]} {
    %c0 = arith.constant 0 : index
    %c0_0 = arith.constant 0 : index
    %0 = vector.load %arg1[%c0, %c0_0] : memref<128x128xf32, #tpu.memory_space<vmem>>, vector<128x128xf32>
    %c0_1 = arith.constant 0 : index
    %c0_2 = arith.constant 0 : index
    %1 = vector.load %arg2[%c0_1, %c0_2] : memref<128x136xf32, #tpu.memory_space<vmem>>, vector<128x136xf32>
    %cst = arith.constant dense<0.000000e+00> : vector<128x136xf32>
    %2 = tpu.matmul %0, %1, %cst {dimension_numbers = #tpu.dot_dimension_numbers<[1], [0], [0], [1], [0, 0, 1, 1], [], []>} : vector<128x128xf32>, vector<128x136xf32>, vector<128x136xf32> -> vector<128x136xf32>
    %c0_3 = arith.constant 0 : index
    %c0_4 = arith.constant 0 : index
    %3 = vector.load %arg3[%c0_3, %c0_4] : memref<1x136xf32, #tpu.memory_space<vmem>>, vector<1x136xf32>
    %4 = vector.broadcast %3 : vector<1x136xf32> to vector<128x136xf32>
    %5 = arith.addf %2, %4 : vector<128x136xf32>
    %cst_5 = arith.constant 5.000000e-01 : f32
    %6 = vector.broadcast %cst_5 : f32 to vector<128x136xf32>
    %7 = arith.mulf %6, %5 : vector<128x136xf32>
    %cst_6 = arith.constant 0.707106769 : f32
    %8 = vector.broadcast %cst_6 : f32 to vector<128x136xf32>
    %9 = arith.mulf %5, %8 : vector<128x136xf32>
    %10 = math.erf %9 : vector<128x136xf32>
    %cst_7 = arith.constant 1.000000e+00 : f32
    %11 = vector.broadcast %cst_7 : f32 to vector<128x136xf32>
    %12 = arith.addf %11, %10 : vector<128x136xf32>
    %13 = arith.mulf %7, %12 : vector<128x136xf32>
    %14 = vector.extract_strided_slice %13 {offsets = [0, 0], sizes = [128, 128], strides = [1, 1]} : vector<128x136xf32> to vector<128x128xf32>
    %15 = vector.extract_strided_slice %13 {offsets = [0, 128], sizes = [128, 8], strides = [1, 1]} : vector<128x136xf32> to vector<128x8xf32>
    %c0_8 = arith.constant 0 : index
    %c0_9 = arith.constant 0 : index
    %16 = vector.load %arg4[%c0_8, %c0_9] : memref<128x128xf32, #tpu.memory_space<vmem>>, vector<128x128xf32>
    %cst_10 = arith.constant dense<0.000000e+00> : vector<128x128xf32>
    %17 = tpu.matmul %14, %16, %cst_10 {dimension_numbers = #tpu.dot_dimension_numbers<[1], [0], [0], [1], [0, 0, 1, 1], [], []>} : vector<128x128xf32>, vector<128x128xf32>, vector<128x128xf32> -> vector<128x128xf32>
    %c0_11 = arith.constant 0 : index
    %c0_12 = arith.constant 0 : index
    %18 = vector.load %arg5[%c0_11, %c0_12] : memref<1x128xf32, #tpu.memory_space<vmem>>, vector<1x128xf32>
    %19 = vector.broadcast %18 : vector<1x128xf32> to vector<128x128xf32>
    %20 = arith.addf %17, %19 : vector<128x128xf32>
    %c0_13 = arith.constant 0 : index
    %c0_14 = arith.constant 0 : index
    %21 = vector.load %arg6[%c0_13, %c0_14] : memref<1x8xf32, #tpu.memory_space<vmem>>, vector<1x8xf32>
    %22 = vector.broadcast %21 : vector<1x8xf32> to vector<128x8xf32>
    %23 = arith.mulf %15, %22 : vector<128x8xf32>
    %24 = vector.extract_strided_slice %23 {offsets = [0, 0], sizes = [128, 2], strides = [1, 1]} : vector<128x8xf32> to vector<128x2xf32>
    %cst_15 = arith.constant dense<0.000000e+00> : vector<128xf32>
    %25 = vector.multi_reduction <add>, %24, %cst_15 [1] : vector<128x2xf32> to vector<128xf32>
    %26 = vector.shape_cast %25 : vector<128xf32> to vector<128x1xf32>
    %c0_16 = arith.constant 0 : index
    %c0_17 = arith.constant 0 : index
    %27 = vector.load %arg7[%c0_16, %c0_17] : memref<1x1xf32, #tpu.memory_space<vmem>>, vector<1x1xf32>
    %28 = vector.broadcast %27 : vector<1x1xf32> to vector<128x1xf32>
    %29 = arith.addf %26, %28 : vector<128x1xf32>
    %30 = arith.negf %29 : vector<128x1xf32>
    %31 = math.exp %30 : vector<128x1xf32>
    %cst_18 = arith.constant 1.000000e+00 : f32
    %32 = vector.broadcast %cst_18 : f32 to vector<128x1xf32>
    %33 = arith.addf %32, %31 : vector<128x1xf32>
    %34 = arith.divf %32, %33 : vector<128x1xf32>
    %c0_19 = arith.constant 0 : index
    %c0_20 = arith.constant 0 : index
    %35 = vector.load %arg8[%c0_19, %c0_20] : memref<1x32xf32, #tpu.memory_space<vmem>>, vector<1x32xf32>
    %36 = vector.broadcast %34 : vector<128x1xf32> to vector<128x32xf32>
    %37 = vector.broadcast %35 : vector<1x32xf32> to vector<128x32xf32>
    %38 = arith.mulf %36, %37 : vector<128x32xf32>
    %c0_21 = arith.constant 0 : index
    %c0_22 = arith.constant 0 : index
    %39 = vector.load %arg9[%c0_21, %c0_22] : memref<1x32xf32, #tpu.memory_space<vmem>>, vector<1x32xf32>
    %40 = vector.broadcast %39 : vector<1x32xf32> to vector<128x32xf32>
    %41 = arith.addf %38, %40 : vector<128x32xf32>
    %42 = vector.extract_strided_slice %23 {offsets = [0, 2], sizes = [128, 2], strides = [1, 1]} : vector<128x8xf32> to vector<128x2xf32>
    %cst_23 = arith.constant dense<0.000000e+00> : vector<128xf32>
    %43 = vector.multi_reduction <add>, %42, %cst_23 [1] : vector<128x2xf32> to vector<128xf32>
    %44 = vector.shape_cast %43 : vector<128xf32> to vector<128x1xf32>
    %c0_24 = arith.constant 0 : index
    %c0_25 = arith.constant 0 : index
    %45 = vector.load %arg7[%c0_24, %c0_25] : memref<1x1xf32, #tpu.memory_space<vmem>>, vector<1x1xf32>
    %46 = vector.broadcast %45 : vector<1x1xf32> to vector<128x1xf32>
    %47 = arith.addf %44, %46 : vector<128x1xf32>
    %48 = arith.negf %47 : vector<128x1xf32>
    %49 = math.exp %48 : vector<128x1xf32>
    %cst_26 = arith.constant 1.000000e+00 : f32
    %50 = vector.broadcast %cst_26 : f32 to vector<128x1xf32>
    %51 = arith.addf %50, %49 : vector<128x1xf32>
    %52 = arith.divf %50, %51 : vector<128x1xf32>
    %c0_27 = arith.constant 0 : index
    %c0_28 = arith.constant 0 : index
    %53 = vector.load %arg8[%c0_27, %c0_28] : memref<1x32xf32, #tpu.memory_space<vmem>>, vector<1x32xf32>
    %54 = vector.broadcast %52 : vector<128x1xf32> to vector<128x32xf32>
    %55 = vector.broadcast %53 : vector<1x32xf32> to vector<128x32xf32>
    %56 = arith.mulf %54, %55 : vector<128x32xf32>
    %c0_29 = arith.constant 0 : index
    %c0_30 = arith.constant 0 : index
    %57 = vector.load %arg9[%c0_29, %c0_30] : memref<1x32xf32, #tpu.memory_space<vmem>>, vector<1x32xf32>
    %58 = vector.broadcast %57 : vector<1x32xf32> to vector<128x32xf32>
    %59 = arith.addf %56, %58 : vector<128x32xf32>
    %60 = vector.extract_strided_slice %23 {offsets = [0, 4], sizes = [128, 2], strides = [1, 1]} : vector<128x8xf32> to vector<128x2xf32>
    %cst_31 = arith.constant dense<0.000000e+00> : vector<128xf32>
    %61 = vector.multi_reduction <add>, %60, %cst_31 [1] : vector<128x2xf32> to vector<128xf32>
    %62 = vector.shape_cast %61 : vector<128xf32> to vector<128x1xf32>
    %c0_32 = arith.constant 0 : index
    %c0_33 = arith.constant 0 : index
    %63 = vector.load %arg7[%c0_32, %c0_33] : memref<1x1xf32, #tpu.memory_space<vmem>>, vector<1x1xf32>
    %64 = vector.broadcast %63 : vector<1x1xf32> to vector<128x1xf32>
    %65 = arith.addf %62, %64 : vector<128x1xf32>
    %66 = arith.negf %65 : vector<128x1xf32>
    %67 = math.exp %66 : vector<128x1xf32>
    %cst_34 = arith.constant 1.000000e+00 : f32
    %68 = vector.broadcast %cst_34 : f32 to vector<128x1xf32>
    %69 = arith.addf %68, %67 : vector<128x1xf32>
    %70 = arith.divf %68, %69 : vector<128x1xf32>
    %c0_35 = arith.constant 0 : index
    %c0_36 = arith.constant 0 : index
    %71 = vector.load %arg8[%c0_35, %c0_36] : memref<1x32xf32, #tpu.memory_space<vmem>>, vector<1x32xf32>
    %72 = vector.broadcast %70 : vector<128x1xf32> to vector<128x32xf32>
    %73 = vector.broadcast %71 : vector<1x32xf32> to vector<128x32xf32>
    %74 = arith.mulf %72, %73 : vector<128x32xf32>
    %c0_37 = arith.constant 0 : index
    %c0_38 = arith.constant 0 : index
    %75 = vector.load %arg9[%c0_37, %c0_38] : memref<1x32xf32, #tpu.memory_space<vmem>>, vector<1x32xf32>
    %76 = vector.broadcast %75 : vector<1x32xf32> to vector<128x32xf32>
    %77 = arith.addf %74, %76 : vector<128x32xf32>
    %78 = vector.extract_strided_slice %23 {offsets = [0, 6], sizes = [128, 2], strides = [1, 1]} : vector<128x8xf32> to vector<128x2xf32>
    %cst_39 = arith.constant dense<0.000000e+00> : vector<128xf32>
    %79 = vector.multi_reduction <add>, %78, %cst_39 [1] : vector<128x2xf32> to vector<128xf32>
    %80 = vector.shape_cast %79 : vector<128xf32> to vector<128x1xf32>
    %c0_40 = arith.constant 0 : index
    %c0_41 = arith.constant 0 : index
    %81 = vector.load %arg7[%c0_40, %c0_41] : memref<1x1xf32, #tpu.memory_space<vmem>>, vector<1x1xf32>
    %82 = vector.broadcast %81 : vector<1x1xf32> to vector<128x1xf32>
    %83 = arith.addf %80, %82 : vector<128x1xf32>
    %84 = arith.negf %83 : vector<128x1xf32>
    %85 = math.exp %84 : vector<128x1xf32>
    %cst_42 = arith.constant 1.000000e+00 : f32
    %86 = vector.broadcast %cst_42 : f32 to vector<128x1xf32>
    %87 = arith.addf %86, %85 : vector<128x1xf32>
    %88 = arith.divf %86, %87 : vector<128x1xf32>
    %c0_43 = arith.constant 0 : index
    %c0_44 = arith.constant 0 : index
    %89 = vector.load %arg8[%c0_43, %c0_44] : memref<1x32xf32, #tpu.memory_space<vmem>>, vector<1x32xf32>
    %90 = vector.broadcast %88 : vector<128x1xf32> to vector<128x32xf32>
    %91 = vector.broadcast %89 : vector<1x32xf32> to vector<128x32xf32>
    %92 = arith.mulf %90, %91 : vector<128x32xf32>
    %c0_45 = arith.constant 0 : index
    %c0_46 = arith.constant 0 : index
    %93 = vector.load %arg9[%c0_45, %c0_46] : memref<1x32xf32, #tpu.memory_space<vmem>>, vector<1x32xf32>
    %94 = vector.broadcast %93 : vector<1x32xf32> to vector<128x32xf32>
    %95 = arith.addf %92, %94 : vector<128x32xf32>
    %96 = tpu.concatenate %41, %59, %77, %95 in 1 : vector<128x32xf32>, vector<128x32xf32>, vector<128x32xf32>, vector<128x32xf32> -> vector<128x128xf32>
    %97 = arith.mulf %96, %20 : vector<128x128xf32>
    %c0_47 = arith.constant 0 : index
    %c0_48 = arith.constant 0 : index
    %98 = vector.load %arg10[%c0_47, %c0_48] : memref<128x128xf32, #tpu.memory_space<vmem>>, vector<128x128xf32>
    tpu.vector_store %arg10[%c0_47, %c0_48], %97 {strides = array<i32>} : memref<128x128xf32, #tpu.memory_space<vmem>>, vector<128x128xf32>,
    return
  }
  func.func @transform_0(%arg0: i32) -> (i32, i32) {
    %c0_i32 = arith.constant 0 : i32
    %c0_i32_0 = arith.constant 0 : i32
    return %arg0, %c0_i32 : i32, i32
  }
  func.func @transform_1(%arg0: i32) -> (i32, i32) {
    %c0_i32 = arith.constant 0 : i32
    %c0_i32_0 = arith.constant 0 : i32
    %c0_i32_1 = arith.constant 0 : i32
    return %c0_i32, %c0_i32_0 : i32, i32
  }
  func.func @transform_2(%arg0: i32) -> (i32, i32) {
    %c0_i32 = arith.constant 0 : i32
    %c0_i32_0 = arith.constant 0 : i32
    %c0_i32_1 = arith.constant 0 : i32
    return %c0_i32, %c0_i32_0 : i32, i32
  }
  func.func @transform_3(%arg0: i32) -> (i32, i32) {
    %c0_i32 = arith.constant 0 : i32
    %c0_i32_0 = arith.constant 0 : i32
    %c0_i32_1 = arith.constant 0 : i32
    return %c0_i32, %c0_i32_0 : i32, i32
  }
  func.func @transform_4(%arg0: i32) -> (i32, i32) {
    %c0_i32 = arith.constant 0 : i32
    %c0_i32_0 = arith.constant 0 : i32
    %c0_i32_1 = arith.constant 0 : i32
    return %c0_i32, %c0_i32_0 : i32, i32
  }
  func.func @transform_5(%arg0: i32) -> (i32, i32) {
    %c0_i32 = arith.constant 0 : i32
    %c0_i32_0 = arith.constant 0 : i32
    %c0_i32_1 = arith.constant 0 : i32
    return %c0_i32, %c0_i32_0 : i32, i32
  }
  func.func @transform_6(%arg0: i32) -> (i32, i32) {
    %c0_i32 = arith.constant 0 : i32
    %c0_i32_0 = arith.constant 0 : i32
    %c0_i32_1 = arith.constant 0 : i32
    return %c0_i32, %c0_i32_0 : i32, i32
  }
  func.func @transform_7(%arg0: i32) -> (i32, i32) {
    %c0_i32 = arith.constant 0 : i32
    %c0_i32_0 = arith.constant 0 : i32
    %c0_i32_1 = arith.constant 0 : i32
    return %c0_i32, %c0_i32_0 : i32, i32
  }
  func.func @transform_8(%arg0: i32) -> (i32, i32) {
    %c0_i32 = arith.constant 0 : i32
    %c0_i32_0 = arith.constant 0 : i32
    %c0_i32_1 = arith.constant 0 : i32
    return %c0_i32, %c0_i32_0 : i32, i32
  }
  func.func @transform_9(%arg0: i32) -> (i32, i32) {
    %c0_i32 = arith.constant 0 : i32
    %c0_i32_0 = arith.constant 0 : i32
    return %arg0, %c0_i32 : i32, i32
  }
}

</mosaic_0001>

<llo_original>
// kernel: sab_pallas_nhwc.1
$region0: #{sab_pallas_nhwc.1}
  #allocation0 [shape = 'u32[]', space=smem, size = 0x4, offset = 0x4, fixed_abs, tag = 'smem constant byte address 0x4 - core index']
  #allocation1 [shape = 'u32[144,128]{1,0:T(1,128)}', space=vmem, size = 0x12000, scoped, tag = 'internal scratch']
  #allocation2 [shape = 'f32[1,1]{1,0:T(1,128)S(1)}', space=vmem, size = 0x200, scoped, tag = 'scoped memory for sab_pallas_nhwc.1']
  %s0 = inlined_call_operand.vmem [shape: f32[128,128], index: 0, kind: input, shape index: {}]
  %s1 = inlined_call_operand.vmem [shape: f32[128,136], index: 1, kind: input, shape index: {}]
  %s2 = inlined_call_operand.vmem [shape: f32[1,136], index: 2, kind: input, shape index: {}]
  %s3 = inlined_call_operand.vmem [shape: f32[128,128], index: 3, kind: input, shape index: {}]
  %s4 = inlined_call_operand.vmem [shape: f32[1,128], index: 4, kind: input, shape index: {}]
  %s5 = inlined_call_operand.vmem [shape: f32[1,8], index: 5, kind: input, shape index: {}]
  %s6 = inlined_call_operand.<no memory space> [shape: f32[1,1], index: 6, kind: input, shape index: {}]
  %s7 = inlined_call_operand.vmem [shape: f32[1,32], index: 7, kind: input, shape index: {}]
  %s8 = inlined_call_operand.vmem [shape: f32[1,32], index: 8, kind: input, shape index: {}]
  %s9 = inlined_call_operand.vmem [shape: f32[128,128], index: 9, kind: output, shape index: {}]
  %s10 = sld [smem:[#allocation0]]
  $region46: #{sab_pallas_nhwc.1} parent=0
    _
  %s12 = ssub.s32 1, %s10
  %s13 = scalar_select 0, %s12, %s10
  %v14 = vstv %s6
  %15 = vst [vmem:[#allocation2] sm:$0x1] %v14
  // Predicated region
  $region2: #{sab_pallas_nhwc.1} parent=0 // pred_check
    _
  $region3: #{sab_pallas_nhwc.1} parent=0 // pred_check_branch
    %17 = sbr.rel (0) target = $region5
  $region4: #{sab_pallas_nhwc.1} parent=0 // pred_region
    _
  $region5: #{sab_pallas_nhwc.1} parent=0 // pred_fallthru
    _
  // Predicated region
  $region6: #{sab_pallas_nhwc.1} parent=0 // pred_check
    _
  $region7: #{sab_pallas_nhwc.1} parent=0 // pred_check_branch
    %19 = sbr.rel (0) target = $region9
  $region8: #{sab_pallas_nhwc.1} parent=0 // pred_region
    _
  $region9: #{sab_pallas_nhwc.1} parent=0 // pred_fallthru
    _
  // Predicated region
  $region10: #{sab_pallas_nhwc.1} parent=0 // pred_check
    _
  $region11: #{sab_pallas_nhwc.1} parent=0 // pred_check_branch
    %21 = sbr.rel (0) target = $region13
  $region12: #{sab_pallas_nhwc.1} parent=0 // pred_region
    _
  $region13: #{sab_pallas_nhwc.1} parent=0 // pred_fallthru
    _
  // Predicated region
  $region14: #{sab_pallas_nhwc.1} parent=0 // pred_check
    _
  $region15: #{sab_pallas_nhwc.1} parent=0 // pred_check_branch
    %23 = sbr.rel (0) target = $region17
  $region16: #{sab_pallas_nhwc.1} parent=0 // pred_region
    _
  $region17: #{sab_pallas_nhwc.1} parent=0 // pred_fallthru
    _
  // Predicated region
  $region18: #{sab_pallas_nhwc.1} parent=0 // pred_check
    _
  $region19: #{sab_pallas_nhwc.1} parent=0 // pred_check_branch
    %25 = sbr.rel (0) target = $region21
  $region20: #{sab_pallas_nhwc.1} parent=0 // pred_region
    _
  $region21: #{sab_pallas_nhwc.1} parent=0 // pred_fallthru
    _
  // Predicated region
  $region22: #{sab_pallas_nhwc.1} parent=0 // pred_check
    _
  $region23: #{sab_pallas_nhwc.1} parent=0 // pred_check_branch
    %27 = sbr.rel (0) target = $region25
  $region24: #{sab_pallas_nhwc.1} parent=0 // pred_region
    _
  $region25: #{sab_pallas_nhwc.1} parent=0 // pred_fallthru
    _
  // Predicated region
  $region26: #{sab_pallas_nhwc.1} parent=0 // pred_check
    _
  $region27: #{sab_pallas_nhwc.1} parent=0 // pred_check_branch
    %29 = sbr.rel (0) target = $region29
  $region28: #{sab_pallas_nhwc.1} parent=0 // pred_region
    _
  $region29: #{sab_pallas_nhwc.1} parent=0 // pred_fallthru
    _
  // Predicated region
  $region30: #{sab_pallas_nhwc.1} parent=0 // pred_check
    _
  $region31: #{sab_pallas_nhwc.1} parent=0 // pred_check_branch
    %31 = sbr.rel (0) target = $region33
  $region32: #{sab_pallas_nhwc.1} parent=0 // pred_region
    _
  $region33: #{sab_pallas_nhwc.1} parent=0 // pred_fallthru
    _
  // Predicated region
  $region34: #{sab_pallas_nhwc.1} parent=0 // pred_check
    _
  $region35: #{sab_pallas_nhwc.1} parent=0 // pred_check_branch
    %33 = sbr.rel (0) target = $region37
  $region36: #{sab_pallas_nhwc.1} parent=0 // pred_region
    _
  $region37: #{sab_pallas_nhwc.1} parent=0 // pred_fallthru
    _
  %v34 = vld [vmem:[%s0] sm:$0xff]
  %v35 = vld [vmem:[%s0 + $0x8] sm:$0xff]
  %v36 = vld [vmem:[%s0 + $0x10] sm:$0xff]
  %v37 = vld [vmem:[%s0 + $0x18] sm:$0xff]
  %v38 = vld [vmem:[%s0 + $0x20] sm:$0xff]
  %v39 = vld [vmem:[%s0 + $0x28] sm:$0xff]
  %v40 = vld [vmem:[%s0 + $0x30] sm:$0xff]
  %v41 = vld [vmem:[%s0 + $0x38] sm:$0xff]
  %v42 = vld [vmem:[%s0 + $0x40] sm:$0xff]
  %v43 = vld [vmem:[%s0 + $0x48] sm:$0xff]
  %v44 = vld [vmem:[%s0 + $0x50] sm:$0xff]
  %v45 = vld [vmem:[%s0 + $0x58] sm:$0xff]
  %v46 = vld [vmem:[%s0 + $0x60] sm:$0xff]
  %v47 = vld [vmem:[%s0 + $0x68] sm:$0xff]
  %v48 = vld [vmem:[%s0 + $0x70] sm:$0xff]
  %v49 = vld [vmem:[%s0 + $0x78] sm:$0xff]
  %v50 = vld [vmem:[%s1] sm:$0xff]
  %v51 = vld [vmem:[%s1 + $0x8] sm:$0xff]
  %v52 = vld [vmem:[%s1 + $0x10] sm:$0xff]
  %v53 = vld [vmem:[%s1 + $0x18] sm:$0xff]
  %v54 = vld [vmem:[%s1 + $0x20] sm:$0xff]
  %v55 = vld [vmem:[%s1 + $0x28] sm:$0xff]
  %v56 = vld [vmem:[%s1 + $0x30] sm:$0xff]
  %v57 = vld [vmem:[%s1 + $0x38] sm:$0xff]
  %v58 = vld [vmem:[%s1 + $0x40] sm:$0xff]
  %v59 = vld [vmem:[%s1 + $0x48] sm:$0xff]
  %v60 = vld [vmem:[%s1 + $0x50] sm:$0xff]
  %v61 = vld [vmem:[%s1 + $0x58] sm:$0xff]
  %v62 = vld [vmem:[%s1 + $0x60] sm:$0xff]
  %v63 = vld [vmem:[%s1 + $0x68] sm:$0xff]
  %v64 = vld [vmem:[%s1 + $0x70] sm:$0xff]
  %v65 = vld [vmem:[%s1 + $0x78] sm:$0xff]
  %v66 = vld [vmem:[%s1 + $0x80] sm:$0xff]
  %v67 = vld [vmem:[%s1 + $0x88] sm:$0xff]
  %v68 = vld [vmem:[%s1 + $0x90] sm:$0xff]
  %v69 = vld [vmem:[%s1 + $0x98] sm:$0xff]
  %v70 = vld [vmem:[%s1 + $0xa0] sm:$0xff]
  %v71 = vld [vmem:[%s1 + $0xa8] sm:$0xff]
  %v72 = vld [vmem:[%s1 + $0xb0] sm:$0xff]
  %v73 = vld [vmem:[%s1 + $0xb8] sm:$0xff]
  %v74 = vld [vmem:[%s1 + $0xc0] sm:$0xff]
  %v75 = vld [vmem:[%s1 + $0xc8] sm:$0xff]
  %v76 = vld [vmem:[%s1 + $0xd0] sm:$0xff]
  %v77 = vld [vmem:[%s1 + $0xd8] sm:$0xff]
  %v78 = vld [vmem:[%s1 + $0xe0] sm:$0xff]
  %v79 = vld [vmem:[%s1 + $0xe8] sm:$0xff]
  %v80 = vld [vmem:[%s1 + $0xf0] sm:$0xff]
  %v81 = vld [vmem:[%s1 + $0xf8] sm:$0xff]
  %v82 = vld [vmem:[%s2] sm:$0x3]
  %v84 = vlaneseq
  %v85 = vshrl.u32 %v84, 7
  %v86 = vsub.s32 0, %v85
  %v87 = vrot.slane %v82, %v86
  %v88 = vlaneseq
  %v89 = vshrl.u32 %v88, 7
  %v90 = vsub.s32 1, %v89
  %v91 = vrot.slane %v82, %v90
  %94 = vmatprep.subr.mxu0 %v51
  %95 = vmatpush1.msra.mxu0 %v50
  %96 = vmatprep.subr.mxu0 %v53
  %97 = vmatpush1.msra.mxu0 %v52
  %98 = vmatprep.subr.mxu0 %v55
  %99 = vmatpush1.msra.mxu0 %v54
  %100 = vmatprep.subr.mxu0 %v57
  %101 = vmatpush1.msra.mxu0 %v56
  %102 = vmatprep.subr.mxu0 %v59
  %103 = vmatpush1.msra.mxu0 %v58
  %104 = vmatprep.subr.mxu0 %v61
  %105 = vmatpush1.msra.mxu0 %v60
  %106 = vmatprep.subr.mxu0 %v63
  %107 = vmatpush1.msra.mxu0 %v62
  %108 = vmatprep.subr.mxu0 %v65
  %109 = vmatpush1.msra.mxu0 %v64
  %110 = vmatprep.subr.mxu0 %v67
  %111 = vmatpush1.msra.mxu0 %v66
  %112 = vmatprep.subr.mxu0 %v69
  %113 = vmatpush1.msra.mxu0 %v68
  %114 = vmatprep.subr.mxu0 %v71
  %115 = vmatpush1.msra.mxu0 %v70
  %116 = vmatprep.subr.mxu0 %v73
  %117 = vmatpush1.msra.mxu0 %v72
  %118 = vmatprep.subr.mxu0 %v75
  %119 = vmatpush1.msra.mxu0 %v74
  %120 = vmatprep.subr.mxu0 %v77
  %121 = vmatpush1.msra.mxu0 %v76
  %122 = vmatprep.subr.mxu0 %v79
  %123 = vmatpush1.msra.mxu0 %v78
  %124 = vmatprep.subr.mxu0 %v81
  %125 = vmatpush1.msra.mxu0 %v80
  %126 = vmatprep.subr.mxu0 0.0
  %127 = vmatpush1.msra.mxu0 0.0
  %128 = vmatprep.subr.mxu0 0.0
  %129 = vmatpush1.msra.mxu0 0.0
  %130 = vmatprep.subr.mxu0 0.0
  %131 = vmatpush1.msra.mxu0 0.0
  %132 = vmatprep.subr.mxu0 0.0
  %133 = vmatpush1.msra.mxu0 0.0
  %134 = vmatprep.subr.mxu0 0.0
  %135 = vmatpush1.msra.mxu0 0.0
  %136 = vmatprep.subr.mxu0 0.0
  %137 = vmatpush1.msra.mxu0 0.0
  %138 = vmatprep.subr.mxu0 0.0
  %139 = vmatpush1.msra.mxu0 0.0
  %140 = vmatprep.subr.mxu0 0.0
  %141 = vmatpush1.msra.mxu0 0.0
  %142 = vmatprep.subr.mxu0 0.0
  %143 = vmatpush1.msra.mxu0 0.0
  %144 = vmatprep.subr.mxu0 0.0
  %145 = vmatpush1.msra.mxu0 0.0
  %146 = vmatprep.subr.mxu0 0.0
  %147 = vmatpush1.msra.mxu0 0.0
  %148 = vmatprep.subr.mxu0 0.0
  %149 = vmatpush1.msra.mxu0 0.0
  %150 = vmatprep.subr.mxu0 0.0
  %151 = vmatpush1.msra.mxu0 0.0
  %152 = vmatprep.subr.mxu0 0.0
  %153 = vmatpush1.msra.mxu0 0.0
  %154 = vmatprep.subr.mxu0 0.0
  %155 = vmatpush1.msra.mxu0 0.0
  %156 = vmatprep.subr.mxu0 0.0
  %157 = vmatpush1.msra.mxu0 0.0
  %158 = vmatprep.mubr.f32.mxu0 0.0
  %159 = vmatmul.mubr.f32.gmra.mrb[0].mxu0 %v34
  %v160 = vpop.f32.mrb[0].mxu0
  %v161 = vadd.f32 %v87, %v160
  %v162 = vpop.f32.mrb[0].mxu0
  %v163 = vadd.f32 %v91, %v162
  %164 = vmatprep.mubr.f32.mxu0 0.0
  %165 = vmatmul.mubr.f32.gmra.mrb[0].mxu0 %v35
  %v166 = vpop.f32.mrb[0].mxu0
  %v167 = vadd.f32 %v87, %v166
  %v168 = vpop.f32.mrb[0].mxu0
  %v169 = vadd.f32 %v91, %v168
  %170 = vmatprep.mubr.f32.mxu0 0.0
  %171 = vmatmul.mubr.f32.gmra.mrb[0].mxu0 %v36
  %v172 = vpop.f32.mrb[0].mxu0
  %v173 = vadd.f32 %v87, %v172
  %v174 = vpop.f32.mrb[0].mxu0
  %v175 = vadd.f32 %v91, %v174
  %176 = vmatprep.mubr.f32.mxu0 0.0
  %177 = vmatmul.mubr.f32.gmra.mrb[0].mxu0 %v37
  %v178 = vpop.f32.mrb[0].mxu0
  %v179 = vadd.f32 %v87, %v178
  %v180 = vpop.f32.mrb[0].mxu0
  %v181 = vadd.f32 %v91, %v180
  %182 = vmatprep.mubr.f32.mxu0 0.0
  %183 = vmatmul.mubr.f32.gmra.mrb[0].mxu0 %v38
  %v184 = vpop.f32.mrb[0].mxu0
  %v185 = vadd.f32 %v87, %v184
  %v186 = vpop.f32.mrb[0].mxu0
  %v187 = vadd.f32 %v91, %v186
  %188 = vmatprep.mubr.f32.mxu0 0.0
  %189 = vmatmul.mubr.f32.gmra.mrb[0].mxu0 %v39
  %v190 = vpop.f32.mrb[0].mxu0
  %v191 = vadd.f32 %v87, %v190
  %v192 = vpop.f32.mrb[0].mxu0
  %v193 = vadd.f32 %v91, %v192
  %194 = vmatprep.mubr.f32.mxu0 0.0
  %195 = vmatmul.mubr.f32.gmra.mrb[0].mxu0 %v40
  %v196 = vpop.f32.mrb[0].mxu0
  %v197 = vadd.f32 %v87, %v196
  %v198 = vpop.f32.mrb[0].mxu0
  %v199 = vadd.f32 %v91, %v198
  %200 = vmatprep.mubr.f32.mxu0 0.0
  %201 = vmatmul.mubr.f32.gmra.mrb[0].mxu0 %v41
  %v202 = vpop.f32.mrb[0].mxu0
  %v203 = vadd.f32 %v87, %v202
  %v204 = vpop.f32.mrb[0].mxu0
  %v205 = vadd.f32 %v91, %v204
  %206 = vmatprep.mubr.f32.mxu0 0.0
  %207 = vmatmul.mubr.f32.gmra.mrb[0].mxu0 %v42
  %v208 = vpop.f32.mrb[0].mxu0
  %v209 = vadd.f32 %v87, %v208
  %v210 = vpop.f32.mrb[0].mxu0
  %v211 = vadd.f32 %v91, %v210
  %212 = vmatprep.mubr.f32.mxu0 0.0
  %213 = vmatmul.mubr.f32.gmra.mrb[0].mxu0 %v43
  %v214 = vpop.f32.mrb[0].mxu0
  %v215 = vadd.f32 %v87, %v214
  %v216 = vpop.f32.mrb[0].mxu0
  %v217 = vadd.f32 %v91, %v216
  %218 = vmatprep.mubr.f32.mxu0 0.0
  %219 = vmatmul.mubr.f32.gmra.mrb[0].mxu0 %v44
  %v220 = vpop.f32.mrb[0].mxu0
  %v221 = vadd.f32 %v87, %v220
  %v222 = vpop.f32.mrb[0].mxu0
  %v223 = vadd.f32 %v91, %v222
  %224 = vmatprep.mubr.f32.mxu0 0.0
  %225 = vmatmul.mubr.f32.gmra.mrb[0].mxu0 %v45
  %v226 = vpop.f32.mrb[0].mxu0
  %v227 = vadd.f32 %v87, %v226
  %v228 = vpop.f32.mrb[0].mxu0
  %v229 = vadd.f32 %v91, %v228
  %230 = vmatprep.mubr.f32.mxu0 0.0
  %231 = vmatmul.mubr.f32.gmra.mrb[0].mxu0 %v46
  %v232 = vpop.f32.mrb[0].mxu0
  %v233 = vadd.f32 %v87, %v232
  %v234 = vpop.f32.mrb[0].mxu0
  %v235 = vadd.f32 %v91, %v234
  %236 = vmatprep.mubr.f32.mxu0 0.0
  %237 = vmatmul.mubr.f32.gmra.mrb[0].mxu0 %v47
  %v238 = vpop.f32.mrb[0].mxu0
  %v239 = vadd.f32 %v87, %v238
  %v240 = vpop.f32.mrb[0].mxu0
  %v241 = vadd.f32 %v91, %v240
  %242 = vmatprep.mubr.f32.mxu0 0.0
  %243 = vmatmul.mubr.f32.gmra.mrb[0].mxu0 %v48
  %v244 = vpop.f32.mrb[0].mxu0
  %v245 = vadd.f32 %v87, %v244
  %v246 = vpop.f32.mrb[0].mxu0
  %v247 = vadd.f32 %v91, %v246
  %248 = vmatprep.mubr.f32.mxu0 0.0
  %249 = vmatmul.mubr.f32.gmra.mrb[0].mxu0 %v49
  %v250 = vpop.f32.mrb[0].mxu0
  %v251 = vadd.f32 %v87, %v250
  %v252 = vpop.f32.mrb[0].mxu0
  %v253 = vadd.f32 %v91, %v252
  %254 = vdwg.mxu0
  %v255 = vmul.f32 %v161, 0.5
  %v256 = vmul.f32 %v163, 0.5
  %v257 = vmul.f32 %v167, 0.5
  %v258 = vmul.f32 %v169, 0.5
  %v259 = vmul.f32 %v173, 0.5
  %v260 = vmul.f32 %v175, 0.5
  %v261 = vmul.f32 %v179, 0.5
  %v262 = vmul.f32 %v181, 0.5
  %v263 = vmul.f32 %v185, 0.5
  %v264 = vmul.f32 %v187, 0.5
  %v265 = vmul.f32 %v191, 0.5
  %v266 = vmul.f32 %v193, 0.5
  %v267 = vmul.f32 %v197, 0.5
  %v268 = vmul.f32 %v199, 0.5
  %v269 = vmul.f32 %v203, 0.5
  %v270 = vmul.f32 %v205, 0.5
  %v271 = vmul.f32 %v209, 0.5
  %v272 = vmul.f32 %v211, 0.5
  %v273 = vmul.f32 %v215, 0.5
  %v274 = vmul.f32 %v217, 0.5
  %v275 = vmul.f32 %v221, 0.5
  %v276 = vmul.f32 %v223, 0.5
  %v277 = vmul.f32 %v227, 0.5
  %v278 = vmul.f32 %v229, 0.5
  %v279 = vmul.f32 %v233, 0.5
  %v280 = vmul.f32 %v235, 0.5
  %v281 = vmul.f32 %v239, 0.5
  %v282 = vmul.f32 %v241, 0.5
  %v283 = vmul.f32 %v245, 0.5
  %v284 = vmul.f32 %v247, 0.5
  %v285 = vmul.f32 %v251, 0.5
  %v286 = vmul.f32 %v253, 0.5
  %v287 = vmul.f32 %v161, 0.70710677
  %v288 = vmul.f32 %v163, 0.70710677
  %v289 = vmul.f32 %v167, 0.70710677
  %v290 = vmul.f32 %v169, 0.70710677
  %v291 = vmul.f32 %v173, 0.70710677
  %v292 = vmul.f32 %v175, 0.70710677
  %v293 = vmul.f32 %v179, 0.70710677
  %v294 = vmul.f32 %v181, 0.70710677
  %v295 = vmul.f32 %v185, 0.70710677
  %v296 = vmul.f32 %v187, 0.70710677
  %v297 = vmul.f32 %v191, 0.70710677
  %v298 = vmul.f32 %v193, 0.70710677
  %v299 = vmul.f32 %v197, 0.70710677
  %v300 = vmul.f32 %v199, 0.70710677
  %v301 = vmul.f32 %v203, 0.70710677
  %v302 = vmul.f32 %v205, 0.70710677
  %v303 = vmul.f32 %v209, 0.70710677
  %v304 = vmul.f32 %v211, 0.70710677
  %v305 = vmul.f32 %v215, 0.70710677
  %v306 = vmul.f32 %v217, 0.70710677
  %v307 = vmul.f32 %v221, 0.70710677
  %v308 = vmul.f32 %v223, 0.70710677
  %v309 = vmul.f32 %v227, 0.70710677
  %v310 = vmul.f32 %v229, 0.70710677
  %v311 = vmul.f32 %v233, 0.70710677
  %v312 = vmul.f32 %v235, 0.70710677
  %v313 = vmul.f32 %v239, 0.70710677
  %v314 = vmul.f32 %v241, 0.70710677
  %v315 = vmul.f32 %v245, 0.70710677
  %v316 = vmul.f32 %v247, 0.70710677
  %v317 = vmul.f32 %v251, 0.70710677
  %v318 = vmul.f32 %v253, 0.70710677
  %v319 = verf.f32.pop %v287
  %v320 = verf.f32.pop %v288
  %v321 = verf.f32.pop %v289
  %v322 = verf.f32.pop %v290
  %v323 = verf.f32.pop %v291
  %v324 = verf.f32.pop %v292
  %v325 = verf.f32.pop %v293
  %v326 = verf.f32.pop %v294
  %v327 = verf.f32.pop %v295
  %v328 = verf.f32.pop %v296
  %v329 = verf.f32.pop %v297
  %v330 = verf.f32.pop %v298
  %v331 = verf.f32.pop %v299
  %v332 = verf.f32.pop %v300
  %v333 = verf.f32.pop %v301
  %v334 = verf.f32.pop %v302
  %v335 = verf.f32.pop %v303
  %v336 = verf.f32.pop %v304
  %v337 = verf.f32.pop %v305
  %v338 = verf.f32.pop %v306
  %v339 = verf.f32.pop %v307
  %v340 = verf.f32.pop %v308
  %v341 = verf.f32.pop %v309
  %v342 = verf.f32.pop %v310
  %v343 = verf.f32.pop %v311
  %v344 = verf.f32.pop %v312
  %v345 = verf.f32.pop %v313
  %v346 = verf.f32.pop %v314
  %v347 = verf.f32.pop %v315
  %v348 = verf.f32.pop %v316
  %v349 = verf.f32.pop %v317
  %v350 = verf.f32.pop %v318
  %v351 = vadd.f32 %v319, 1.0
  %v352 = vadd.f32 %v320, 1.0
  %v353 = vadd.f32 %v321, 1.0
  %v354 = vadd.f32 %v322, 1.0
  %v355 = vadd.f32 %v323, 1.0
  %v356 = vadd.f32 %v324, 1.0
  %v357 = vadd.f32 %v325, 1.0
  %v358 = vadd.f32 %v326, 1.0
  %v359 = vadd.f32 %v327, 1.0
  %v360 = vadd.f32 %v328, 1.0
  %v361 = vadd.f32 %v329, 1.0
  %v362 = vadd.f32 %v330, 1.0
  %v363 = vadd.f32 %v331, 1.0
  %v364 = vadd.f32 %v332, 1.0
  %v365 = vadd.f32 %v333, 1.0
  %v366 = vadd.f32 %v334, 1.0
  %v367 = vadd.f32 %v335, 1.0
  %v368 = vadd.f32 %v336, 1.0
  %v369 = vadd.f32 %v337, 1.0
  %v370 = vadd.f32 %v338, 1.0
  %v371 = vadd.f32 %v339, 1.0
  %v372 = vadd.f32 %v340, 1.0
  %v373 = vadd.f32 %v341, 1.0
  %v374 = vadd.f32 %v342, 1.0
  %v375 = vadd.f32 %v343, 1.0
  %v376 = vadd.f32 %v344, 1.0
  %v377 = vadd.f32 %v345, 1.0
  %v378 = vadd.f32 %v346, 1.0
  %v379 = vadd.f32 %v347, 1.0
  %v380 = vadd.f32 %v348, 1.0
  %v381 = vadd.f32 %v349, 1.0
  %v382 = vadd.f32 %v350, 1.0
  %v383 = vmul.f32 %v255, %v351
  %v384 = vmul.f32 %v256, %v352
  %v385 = vmul.f32 %v257, %v353
  %v386 = vmul.f32 %v258, %v354
  %v387 = vmul.f32 %v259, %v355
  %v388 = vmul.f32 %v260, %v356
  %v389 = vmul.f32 %v261, %v357
  %v390 = vmul.f32 %v262, %v358
  %v391 = vmul.f32 %v263, %v359
  %v392 = vmul.f32 %v264, %v360
  %v393 = vmul.f32 %v265, %v361
  %v394 = vmul.f32 %v266, %v362
  %v395 = vmul.f32 %v267, %v363
  %v396 = vmul.f32 %v268, %v364
  %v397 = vmul.f32 %v269, %v365
  %v398 = vmul.f32 %v270, %v366
  %v399 = vmul.f32 %v271, %v367
  %v400 = vmul.f32 %v272, %v368
  %v401 = vmul.f32 %v273, %v369
  %v402 = vmul.f32 %v274, %v370
  %v403 = vmul.f32 %v275, %v371
  %v404 = vmul.f32 %v276, %v372
  %v405 = vmul.f32 %v277, %v373
  %v406 = vmul.f32 %v278, %v374
  %v407 = vmul.f32 %v279, %v375
  %v408 = vmul.f32 %v280, %v376
  %v409 = vmul.f32 %v281, %v377
  %v410 = vmul.f32 %v282, %v378
  %v411 = vmul.f32 %v283, %v379
  %v412 = vmul.f32 %v284, %v380
  %v413 = vmul.f32 %v285, %v381
  %v414 = vmul.f32 %v286, %v382
  %v415 = vld [vmem:[%s3] sm:$0xff]
  %v416 = vld [vmem:[%s3 + $0x8] sm:$0xff]
  %v417 = vld [vmem:[%s3 + $0x10] sm:$0xff]
  %v418 = vld [vmem:[%s3 + $0x18] sm:$0xff]
  %v419 = vld [vmem:[%s3 + $0x20] sm:$0xff]
  %v420 = vld [vmem:[%s3 + $0x28] sm:$0xff]
  %v421 = vld [vmem:[%s3 + $0x30] sm:$0xff]
  %v422 = vld [vmem:[%s3 + $0x38] sm:$0xff]
  %v423 = vld [vmem:[%s3 + $0x40] sm:$0xff]
  %v424 = vld [vmem:[%s3 + $0x48] sm:$0xff]
  %v425 = vld [vmem:[%s3 + $0x50] sm:$0xff]
  %v426 = vld [vmem:[%s3 + $0x58] sm:$0xff]
  %v427 = vld [vmem:[%s3 + $0x60] sm:$0xff]
  %v428 = vld [vmem:[%s3 + $0x68] sm:$0xff]
  %v429 = vld [vmem:[%s3 + $0x70] sm:$0xff]
  %v430 = vld [vmem:[%s3 + $0x78] sm:$0xff]
  %v431 = vld [vmem:[%s4] sm:$0x1]
  %v433 = vlaneseq
  %v434 = vshrl.u32 %v433, 7
  %v435 = vsub.s32 0, %v434
  %v436 = vrot.slane %v431, %v435
  %438 = vmatprep.subr.mxu0 0.0
  %439 = vmatpush1.msra.mxu0 %v415
  %440 = vmatprep.subr.mxu0 0.0
  %441 = vmatpush1.msra.mxu0 %v416
  %442 = vmatprep.subr.mxu0 0.0
  %443 = vmatpush1.msra.mxu0 %v417
  %444 = vmatprep.subr.mxu0 0.0
  %445 = vmatpush1.msra.mxu0 %v418
  %446 = vmatprep.subr.mxu0 0.0
  %447 = vmatpush1.msra.mxu0 %v419
  %448 = vmatprep.subr.mxu0 0.0
  %449 = vmatpush1.msra.mxu0 %v420
  %450 = vmatprep.subr.mxu0 0.0
  %451 = vmatpush1.msra.mxu0 %v421
  %452 = vmatprep.subr.mxu0 0.0
  %453 = vmatpush1.msra.mxu0 %v422
  %454 = vmatprep.subr.mxu0 0.0
  %455 = vmatpush1.msra.mxu0 %v423
  %456 = vmatprep.subr.mxu0 0.0
  %457 = vmatpush1.msra.mxu0 %v424
  %458 = vmatprep.subr.mxu0 0.0
  %459 = vmatpush1.msra.mxu0 %v425
  %460 = vmatprep.subr.mxu0 0.0
  %461 = vmatpush1.msra.mxu0 %v426
  %462 = vmatprep.subr.mxu0 0.0
  %463 = vmatpush1.msra.mxu0 %v427
  %464 = vmatprep.subr.mxu0 0.0
  %465 = vmatpush1.msra.mxu0 %v428
  %466 = vmatprep.subr.mxu0 0.0
  %467 = vmatpush1.msra.mxu0 %v429
  %468 = vmatprep.subr.mxu0 0.0
  %469 = vmatpush1.msra.mxu0 %v430
  %470 = vmatprep.subr.mxu0 0.0
  %471 = vmatpush1.msra.mxu0 0.0
  %472 = vmatprep.subr.mxu0 0.0
  %473 = vmatpush1.msra.mxu0 0.0
  %474 = vmatprep.subr.mxu0 0.0
  %475 = vmatpush1.msra.mxu0 0.0
  %476 = vmatprep.subr.mxu0 0.0
  %477 = vmatpush1.msra.mxu0 0.0
  %478 = vmatprep.subr.mxu0 0.0
  %479 = vmatpush1.msra.mxu0 0.0
  %480 = vmatprep.subr.mxu0 0.0
  %481 = vmatpush1.msra.mxu0 0.0
  %482 = vmatprep.subr.mxu0 0.0
  %483 = vmatpush1.msra.mxu0 0.0
  %484 = vmatprep.subr.mxu0 0.0
  %485 = vmatpush1.msra.mxu0 0.0
  %486 = vmatprep.subr.mxu0 0.0
  %487 = vmatpush1.msra.mxu0 0.0
  %488 = vmatprep.subr.mxu0 0.0
  %489 = vmatpush1.msra.mxu0 0.0
  %490 = vmatprep.subr.mxu0 0.0
  %491 = vmatpush1.msra.mxu0 0.0
  %492 = vmatprep.subr.mxu0 0.0
  %493 = vmatpush1.msra.mxu0 0.0
  %494 = vmatprep.subr.mxu0 0.0
  %495 = vmatpush1.msra.mxu0 0.0
  %496 = vmatprep.subr.mxu0 0.0
  %497 = vmatpush1.msra.mxu0 0.0
  %498 = vmatprep.subr.mxu0 0.0
  %499 = vmatpush1.msra.mxu0 0.0
  %500 = vmatprep.subr.mxu0 0.0
  %501 = vmatpush1.msra.mxu0 0.0
  %502 = vmatprep.mubr.f32.mxu0 0.0
  %503 = vmatmul.mubr.f32.gmra.mrb[0].mxu0 %v383
  %v504 = vpop.f32.mrb[0].mxu0
  %v505 = vadd.f32 %v436, %v504
  %v506 = vpop.f32.mrb[0].mxu0
  %507 = vmatprep.mubr.f32.mxu0 0.0
  %508 = vmatmul.mubr.f32.gmra.mrb[0].mxu0 %v385
  %v509 = vpop.f32.mrb[0].mxu0
  %v510 = vadd.f32 %v436, %v509
  %v511 = vpop.f32.mrb[0].mxu0
  %512 = vmatprep.mubr.f32.mxu0 0.0
  %513 = vmatmul.mubr.f32.gmra.mrb[0].mxu0 %v387
  %v514 = vpop.f32.mrb[0].mxu0
  %v515 = vadd.f32 %v436, %v514
  %v516 = vpop.f32.mrb[0].mxu0
  %517 = vmatprep.mubr.f32.mxu0 0.0
  %518 = vmatmul.mubr.f32.gmra.mrb[0].mxu0 %v389
  %v519 = vpop.f32.mrb[0].mxu0
  %v520 = vadd.f32 %v436, %v519
  %v521 = vpop.f32.mrb[0].mxu0
  %522 = vmatprep.mubr.f32.mxu0 0.0
  %523 = vmatmul.mubr.f32.gmra.mrb[0].mxu0 %v391
  %v524 = vpop.f32.mrb[0].mxu0
  %v525 = vadd.f32 %v436, %v524
  %v526 = vpop.f32.mrb[0].mxu0
  %527 = vmatprep.mubr.f32.mxu0 0.0
  %528 = vmatmul.mubr.f32.gmra.mrb[0].mxu0 %v393
  %v529 = vpop.f32.mrb[0].mxu0
  %v530 = vadd.f32 %v436, %v529
  %v531 = vpop.f32.mrb[0].mxu0
  %532 = vmatprep.mubr.f32.mxu0 0.0
  %533 = vmatmul.mubr.f32.gmra.mrb[0].mxu0 %v395
  %v534 = vpop.f32.mrb[0].mxu0
  %v535 = vadd.f32 %v436, %v534
  %v536 = vpop.f32.mrb[0].mxu0
  %537 = vmatprep.mubr.f32.mxu0 0.0
  %538 = vmatmul.mubr.f32.gmra.mrb[0].mxu0 %v397
  %v539 = vpop.f32.mrb[0].mxu0
  %v540 = vadd.f32 %v436, %v539
  %v541 = vpop.f32.mrb[0].mxu0
  %542 = vmatprep.mubr.f32.mxu0 0.0
  %543 = vmatmul.mubr.f32.gmra.mrb[0].mxu0 %v399
  %v544 = vpop.f32.mrb[0].mxu0
  %v545 = vadd.f32 %v436, %v544
  %v546 = vpop.f32.mrb[0].mxu0
  %547 = vmatprep.mubr.f32.mxu0 0.0
  %548 = vmatmul.mubr.f32.gmra.mrb[0].mxu0 %v401
  %v549 = vpop.f32.mrb[0].mxu0
  %v550 = vadd.f32 %v436, %v549
  %v551 = vpop.f32.mrb[0].mxu0
  %552 = vmatprep.mubr.f32.mxu0 0.0
  %553 = vmatmul.mubr.f32.gmra.mrb[0].mxu0 %v403
  %v554 = vpop.f32.mrb[0].mxu0
  %v555 = vadd.f32 %v436, %v554
  %v556 = vpop.f32.mrb[0].mxu0
  %557 = vmatprep.mubr.f32.mxu0 0.0
  %558 = vmatmul.mubr.f32.gmra.mrb[0].mxu0 %v405
  %v559 = vpop.f32.mrb[0].mxu0
  %v560 = vadd.f32 %v436, %v559
  %v561 = vpop.f32.mrb[0].mxu0
  %562 = vmatprep.mubr.f32.mxu0 0.0
  %563 = vmatmul.mubr.f32.gmra.mrb[0].mxu0 %v407
  %v564 = vpop.f32.mrb[0].mxu0
  %v565 = vadd.f32 %v436, %v564
  %v566 = vpop.f32.mrb[0].mxu0
  %567 = vmatprep.mubr.f32.mxu0 0.0
  %568 = vmatmul.mubr.f32.gmra.mrb[0].mxu0 %v409
  %v569 = vpop.f32.mrb[0].mxu0
  %v570 = vadd.f32 %v436, %v569
  %v571 = vpop.f32.mrb[0].mxu0
  %572 = vmatprep.mubr.f32.mxu0 0.0
  %573 = vmatmul.mubr.f32.gmra.mrb[0].mxu0 %v411
  %v574 = vpop.f32.mrb[0].mxu0
  %v575 = vadd.f32 %v436, %v574
  %v576 = vpop.f32.mrb[0].mxu0
  %577 = vmatprep.mubr.f32.mxu0 0.0
  %578 = vmatmul.mubr.f32.gmra.mrb[0].mxu0 %v413
  %v579 = vpop.f32.mrb[0].mxu0
  %v580 = vadd.f32 %v436, %v579
  %v581 = vpop.f32.mrb[0].mxu0
  %582 = vdwg.mxu0
  %v583 = vld [vmem:[%s5] sm:$0x1]
  %v585 = vlaneseq
  %v586 = vshrl.u32 %v585, 7
  %v587 = vsub.s32 0, %v586
  %v588 = vrot.slane %v583, %v587
  %v590 = vmul.f32 %v384, %v588
  %v591 = vmul.f32 %v386, %v588
  %v592 = vmul.f32 %v388, %v588
  %v593 = vmul.f32 %v390, %v588
  %v594 = vmul.f32 %v392, %v588
  %v595 = vmul.f32 %v394, %v588
  %v596 = vmul.f32 %v396, %v588
  %v597 = vmul.f32 %v398, %v588
  %v598 = vmul.f32 %v400, %v588
  %v599 = vmul.f32 %v402, %v588
  %v600 = vmul.f32 %v404, %v588
  %v601 = vmul.f32 %v406, %v588
  %v602 = vmul.f32 %v408, %v588
  %v603 = vmul.f32 %v410, %v588
  %v604 = vmul.f32 %v412, %v588
  %v605 = vmul.f32 %v414, %v588
  %vm606 = vcmask 15360
  %v607 = vsel %vm606, %v590, 0.0
  %608 = vadd.xlane.f32.xlu0 %v607
  %v609 = vpop.xlane.xlu0 %608
  %v610 = vsel %vm606, %v591, 0.0
  %611 = vadd.xlane.f32.xlu0 %v610
  %v612 = vpop.xlane.xlu0 %611
  %v613 = vsel %vm606, %v592, 0.0
  %614 = vadd.xlane.f32.xlu0 %v613
  %v615 = vpop.xlane.xlu0 %614
  %v616 = vsel %vm606, %v593, 0.0
  %617 = vadd.xlane.f32.xlu0 %v616
  %v618 = vpop.xlane.xlu0 %617
  %v619 = vsel %vm606, %v594, 0.0
  %620 = vadd.xlane.f32.xlu0 %v619
  %v621 = vpop.xlane.xlu0 %620
  %v622 = vsel %vm606, %v595, 0.0
  %623 = vadd.xlane.f32.xlu0 %v622
  %v624 = vpop.xlane.xlu0 %623
  %v625 = vsel %vm606, %v596, 0.0
  %626 = vadd.xlane.f32.xlu0 %v625
  %v627 = vpop.xlane.xlu0 %626
  %v628 = vsel %vm606, %v597, 0.0
  %629 = vadd.xlane.f32.xlu0 %v628
  %v630 = vpop.xlane.xlu0 %629
  %v631 = vsel %vm606, %v598, 0.0
  %632 = vadd.xlane.f32.xlu0 %v631
  %v633 = vpop.xlane.xlu0 %632
  %v634 = vsel %vm606, %v599, 0.0
  %635 = vadd.xlane.f32.xlu0 %v634
  %v636 = vpop.xlane.xlu0 %635
  %v637 = vsel %vm606, %v600, 0.0
  %638 = vadd.xlane.f32.xlu0 %v637
  %v639 = vpop.xlane.xlu0 %638
  %v640 = vsel %vm606, %v601, 0.0
  %641 = vadd.xlane.f32.xlu0 %v640
  %v642 = vpop.xlane.xlu0 %641
  %v643 = vsel %vm606, %v602, 0.0
  %644 = vadd.xlane.f32.xlu0 %v643
  %v645 = vpop.xlane.xlu0 %644
  %v646 = vsel %vm606, %v603, 0.0
  %647 = vadd.xlane.f32.xlu0 %v646
  %v648 = vpop.xlane.xlu0 %647
  %v649 = vsel %vm606, %v604, 0.0
  %650 = vadd.xlane.f32.xlu0 %v649
  %v651 = vpop.xlane.xlu0 %650
  %v652 = vsel %vm606, %v605, 0.0
  %653 = vadd.xlane.f32.xlu0 %v652
  %v654 = vpop.xlane.xlu0 %653
  %v655 = vld [vmem:[#allocation2] sm:$0x1]
  %v657 = vlaneseq
  %v658 = vshrl.u32 %v657, 7
  %v659 = vsub.s32 0, %v658
  %v660 = vrot.slane %v655, %v659
  %v662 = vadd.f32 %v609, %v660
  %v663 = vadd.f32 %v612, %v660
  %v664 = vadd.f32 %v615, %v660
  %v665 = vadd.f32 %v618, %v660
  %v666 = vadd.f32 %v621, %v660
  %v667 = vadd.f32 %v624, %v660
  %v668 = vadd.f32 %v627, %v660
  %v669 = vadd.f32 %v630, %v660
  %v670 = vadd.f32 %v633, %v660
  %v671 = vadd.f32 %v636, %v660
  %v672 = vadd.f32 %v639, %v660
  %v673 = vadd.f32 %v642, %v660
  %v674 = vadd.f32 %v645, %v660
  %v675 = vadd.f32 %v648, %v660
  %v676 = vadd.f32 %v651, %v660
  %v677 = vadd.f32 %v654, %v660
  %v678 = vxor.u32 %v662, 2147483648
  %v679 = vxor.u32 %v663, 2147483648
  %v680 = vxor.u32 %v664, 2147483648
  %v681 = vxor.u32 %v665, 2147483648
  %v682 = vxor.u32 %v666, 2147483648
  %v683 = vxor.u32 %v667, 2147483648
  %v684 = vxor.u32 %v668, 2147483648
  %v685 = vxor.u32 %v669, 2147483648
  %v686 = vxor.u32 %v670, 2147483648
  %v687 = vxor.u32 %v671, 2147483648
  %v688 = vxor.u32 %v672, 2147483648
  %v689 = vxor.u32 %v673, 2147483648
  %v690 = vxor.u32 %v674, 2147483648
  %v691 = vxor.u32 %v675, 2147483648
  %v692 = vxor.u32 %v676, 2147483648
  %v693 = vxor.u32 %v677, 2147483648
  %v694 = vmul.f32 %v678, 1.442695
  %v695 = vpow.pop %v694
  %v696 = vmul.f32 %v679, 1.442695
  %v697 = vpow.pop %v696
  %v698 = vmul.f32 %v680, 1.442695
  %v699 = vpow.pop %v698
  %v700 = vmul.f32 %v681, 1.442695
  %v701 = vpow.pop %v700
  %v702 = vmul.f32 %v682, 1.442695
  %v703 = vpow.pop %v702
  %v704 = vmul.f32 %v683, 1.442695
  %v705 = vpow.pop %v704
  %v706 = vmul.f32 %v684, 1.442695
  %v707 = vpow.pop %v706
  %v708 = vmul.f32 %v685, 1.442695
  %v709 = vpow.pop %v708
  %v710 = vmul.f32 %v686, 1.442695
  %v711 = vpow.pop %v710
  %v712 = vmul.f32 %v687, 1.442695
  %v713 = vpow.pop %v712
  %v714 = vmul.f32 %v688, 1.442695
  %v715 = vpow.pop %v714
  %v716 = vmul.f32 %v689, 1.442695
  %v717 = vpow.pop %v716
  %v718 = vmul.f32 %v690, 1.442695
  %v719 = vpow.pop %v718
  %v720 = vmul.f32 %v691, 1.442695
  %v721 = vpow.pop %v720
  %v722 = vmul.f32 %v692, 1.442695
  %v723 = vpow.pop %v722
  %v724 = vmul.f32 %v693, 1.442695
  %v725 = vpow.pop %v724
  %v726 = vadd.f32 %v695, 1.0
  %v727 = vadd.f32 %v697, 1.0
  %v728 = vadd.f32 %v699, 1.0
  %v729 = vadd.f32 %v701, 1.0
  %v730 = vadd.f32 %v703, 1.0
  %v731 = vadd.f32 %v705, 1.0
  %v732 = vadd.f32 %v707, 1.0
  %v733 = vadd.f32 %v709, 1.0
  %v734 = vadd.f32 %v711, 1.0
  %v735 = vadd.f32 %v713, 1.0
  %v736 = vadd.f32 %v715, 1.0
  %v737 = vadd.f32 %v717, 1.0
  %v738 = vadd.f32 %v719, 1.0
  %v739 = vadd.f32 %v721, 1.0
  %v740 = vadd.f32 %v723, 1.0
  %v741 = vadd.f32 %v725, 1.0
  %v742 = vrcp.pop %v726
  %v743 = vmul.f32 1.0, %v742
  %v744 = vrcp.pop %v727
  %v745 = vmul.f32 1.0, %v744
  %v746 = vrcp.pop %v728
  %v747 = vmul.f32 1.0, %v746
  %v748 = vrcp.pop %v729
  %v749 = vmul.f32 1.0, %v748
  %v750 = vrcp.pop %v730
  %v751 = vmul.f32 1.0, %v750
  %v752 = vrcp.pop %v731
  %v753 = vmul.f32 1.0, %v752
  %v754 = vrcp.pop %v732
  %v755 = vmul.f32 1.0, %v754
  %v756 = vrcp.pop %v733
  %v757 = vmul.f32 1.0, %v756
  %v758 = vrcp.pop %v734
  %v759 = vmul.f32 1.0, %v758
  %v760 = vrcp.pop %v735
  %v761 = vmul.f32 1.0, %v760
  %v762 = vrcp.pop %v736
  %v763 = vmul.f32 1.0, %v762
  %v764 = vrcp.pop %v737
  %v765 = vmul.f32 1.0, %v764
  %v766 = vrcp.pop %v738
  %v767 = vmul.f32 1.0, %v766
  %v768 = vrcp.pop %v739
  %v769 = vmul.f32 1.0, %v768
  %v770 = vrcp.pop %v740
  %v771 = vmul.f32 1.0, %v770
  %v772 = vrcp.pop %v741
  %v773 = vmul.f32 1.0, %v772
  %v774 = vld [vmem:[%s7] sm:$0x1]
  %776 = vset.pattern.permute.xlu0 0
  %777 = vperm.xlu0 %776, %v743
  %v778 = vpop.permute.xlu0 %777
  %781 = vset.pattern.permute.xlu0 0
  %782 = vperm.xlu0 %781, %v745
  %v783 = vpop.permute.xlu0 %782
  %786 = vset.pattern.permute.xlu0 0
  %787 = vperm.xlu0 %786, %v747
  %v788 = vpop.permute.xlu0 %787
  %791 = vset.pattern.permute.xlu0 0
  %792 = vperm.xlu0 %791, %v749
  %v793 = vpop.permute.xlu0 %792
  %796 = vset.pattern.permute.xlu0 0
  %797 = vperm.xlu0 %796, %v751
  %v798 = vpop.permute.xlu0 %797
  %801 = vset.pattern.permute.xlu0 0
  %802 = vperm.xlu0 %801, %v753
  %v803 = vpop.permute.xlu0 %802
  %806 = vset.pattern.permute.xlu0 0
  %807 = vperm.xlu0 %806, %v755
  %v808 = vpop.permute.xlu0 %807
  %811 = vset.pattern.permute.xlu0 0
  %812 = vperm.xlu0 %811, %v757
  %v813 = vpop.permute.xlu0 %812
  %816 = vset.pattern.permute.xlu0 0
  %817 = vperm.xlu0 %816, %v759
  %v818 = vpop.permute.xlu0 %817
  %821 = vset.pattern.permute.xlu0 0
  %822 = vperm.xlu0 %821, %v761
  %v823 = vpop.permute.xlu0 %822
  %826 = vset.pattern.permute.xlu0 0
  %827 = vperm.xlu0 %826, %v763
  %v828 = vpop.permute.xlu0 %827
  %831 = vset.pattern.permute.xlu0 0
  %832 = vperm.xlu0 %831, %v765
  %v833 = vpop.permute.xlu0 %832
  %836 = vset.pattern.permute.xlu0 0
  %837 = vperm.xlu0 %836, %v767
  %v838 = vpop.permute.xlu0 %837
  %841 = vset.pattern.permute.xlu0 0
  %842 = vperm.xlu0 %841, %v769
  %v843 = vpop.permute.xlu0 %842
  %846 = vset.pattern.permute.xlu0 0
  %847 = vperm.xlu0 %846, %v771
  %v848 = vpop.permute.xlu0 %847
  %851 = vset.pattern.permute.xlu0 0
  %852 = vperm.xlu0 %851, %v773
  %v853 = vpop.permute.xlu0 %852
  %v856 = vlaneseq
  %v857 = vshrl.u32 %v856, 7
  %v858 = vsub.s32 0, %v857
  %v859 = vrot.slane %v774, %v858
  %v861 = vmul.f32 %v778, %v859
  %v862 = vmul.f32 %v783, %v859
  %v863 = vmul.f32 %v788, %v859
  %v864 = vmul.f32 %v793, %v859
  %v865 = vmul.f32 %v798, %v859
  %v866 = vmul.f32 %v803, %v859
  %v867 = vmul.f32 %v808, %v859
  %v868 = vmul.f32 %v813, %v859
  %v869 = vmul.f32 %v818, %v859
  %v870 = vmul.f32 %v823, %v859
  %v871 = vmul.f32 %v828, %v859
  %v872 = vmul.f32 %v833, %v859
  %v873 = vmul.f32 %v838, %v859
  %v874 = vmul.f32 %v843, %v859
  %v875 = vmul.f32 %v848, %v859
  %v876 = vmul.f32 %v853, %v859
  %v877 = vld [vmem:[%s8] sm:$0x1]
  %v879 = vlaneseq
  %v880 = vshrl.u32 %v879, 7
  %v881 = vsub.s32 0, %v880
  %v882 = vrot.slane %v877, %v881
  %v884 = vadd.f32 %v861, %v882
  %v885 = vadd.f32 %v862, %v882
  %v886 = vadd.f32 %v863, %v882
  %v887 = vadd.f32 %v864, %v882
  %v888 = vadd.f32 %v865, %v882
  %v889 = vadd.f32 %v866, %v882
  %v890 = vadd.f32 %v867, %v882
  %v891 = vadd.f32 %v868, %v882
  %v892 = vadd.f32 %v869, %v882
  %v893 = vadd.f32 %v870, %v882
  %v894 = vadd.f32 %v871, %v882
  %v895 = vadd.f32 %v872, %v882
  %v896 = vadd.f32 %v873, %v882
  %v897 = vadd.f32 %v874, %v882
  %v898 = vadd.f32 %v875, %v882
  %v899 = vadd.f32 %v876, %v882
  %916 = vrot.lane.b32.xlu0 %v590, 126
  %v917 = vpop.permute.xlu0 %916
  %918 = vrot.lane.b32.xlu0 %v591, 126
  %v919 = vpop.permute.xlu0 %918
  %920 = vrot.lane.b32.xlu0 %v592, 126
  %v921 = vpop.permute.xlu0 %920
  %922 = vrot.lane.b32.xlu0 %v593, 126
  %v923 = vpop.permute.xlu0 %922
  %924 = vrot.lane.b32.xlu0 %v594, 126
  %v925 = vpop.permute.xlu0 %924
  %926 = vrot.lane.b32.xlu0 %v595, 126
  %v927 = vpop.permute.xlu0 %926
  %928 = vrot.lane.b32.xlu0 %v596, 126
  %v929 = vpop.permute.xlu0 %928
  %930 = vrot.lane.b32.xlu0 %v597, 126
  %v931 = vpop.permute.xlu0 %930
  %932 = vrot.lane.b32.xlu0 %v598, 126
  %v933 = vpop.permute.xlu0 %932
  %934 = vrot.lane.b32.xlu0 %v599, 126
  %v935 = vpop.permute.xlu0 %934
  %936 = vrot.lane.b32.xlu0 %v600, 126
  %v937 = vpop.permute.xlu0 %936
  %938 = vrot.lane.b32.xlu0 %v601, 126
  %v939 = vpop.permute.xlu0 %938
  %940 = vrot.lane.b32.xlu0 %v602, 126
  %v941 = vpop.permute.xlu0 %940
  %942 = vrot.lane.b32.xlu0 %v603, 126
  %v943 = vpop.permute.xlu0 %942
  %944 = vrot.lane.b32.xlu0 %v604, 126
  %v945 = vpop.permute.xlu0 %944
  %946 = vrot.lane.b32.xlu0 %v605, 126
  %v947 = vpop.permute.xlu0 %946
  %v964 = vsel %vm606, %v917, 0.0
  %965 = vadd.xlane.f32.xlu0 %v964
  %v966 = vpop.xlane.xlu0 %965
  %v967 = vsel %vm606, %v919, 0.0
  %968 = vadd.xlane.f32.xlu0 %v967
  %v969 = vpop.xlane.xlu0 %968
  %v970 = vsel %vm606, %v921, 0.0
  %971 = vadd.xlane.f32.xlu0 %v970
  %v972 = vpop.xlane.xlu0 %971
  %v973 = vsel %vm606, %v923, 0.0
  %974 = vadd.xlane.f32.xlu0 %v973
  %v975 = vpop.xlane.xlu0 %974
  %v976 = vsel %vm606, %v925, 0.0
  %977 = vadd.xlane.f32.xlu0 %v976
  %v978 = vpop.xlane.xlu0 %977
  %v979 = vsel %vm606, %v927, 0.0
  %980 = vadd.xlane.f32.xlu0 %v979
  %v981 = vpop.xlane.xlu0 %980
  %v982 = vsel %vm606, %v929, 0.0
  %983 = vadd.xlane.f32.xlu0 %v982
  %v984 = vpop.xlane.xlu0 %983
  %v985 = vsel %vm606, %v931, 0.0
  %986 = vadd.xlane.f32.xlu0 %v985
  %v987 = vpop.xlane.xlu0 %986
  %v988 = vsel %vm606, %v933, 0.0
  %989 = vadd.xlane.f32.xlu0 %v988
  %v990 = vpop.xlane.xlu0 %989
  %v991 = vsel %vm606, %v935, 0.0
  %992 = vadd.xlane.f32.xlu0 %v991
  %v993 = vpop.xlane.xlu0 %992
  %v994 = vsel %vm606, %v937, 0.0
  %995 = vadd.xlane.f32.xlu0 %v994
  %v996 = vpop.xlane.xlu0 %995
  %v997 = vsel %vm606, %v939, 0.0
  %998 = vadd.xlane.f32.xlu0 %v997
  %v999 = vpop.xlane.xlu0 %998
  %v1000 = vsel %vm606, %v941, 0.0
  %1001 = vadd.xlane.f32.xlu0 %v1000
  %v1002 = vpop.xlane.xlu0 %1001
  %v1003 = vsel %vm606, %v943, 0.0
  %1004 = vadd.xlane.f32.xlu0 %v1003
  %v1005 = vpop.xlane.xlu0 %1004
  %v1006 = vsel %vm606, %v945, 0.0
  %1007 = vadd.xlane.f32.xlu0 %v1006
  %v1008 = vpop.xlane.xlu0 %1007
  %v1009 = vsel %vm606, %v947, 0.0
  %1010 = vadd.xlane.f32.xlu0 %v1009
  %v1011 = vpop.xlane.xlu0 %1010
  %v1012 = vadd.f32 %v966, %v660
  %v1013 = vadd.f32 %v969, %v660
  %v1014 = vadd.f32 %v972, %v660
  %v1015 = vadd.f32 %v975, %v660
  %v1016 = vadd.f32 %v978, %v660
  %v1017 = vadd.f32 %v981, %v660
  %v1018 = vadd.f32 %v984, %v660
  %v1019 = vadd.f32 %v987, %v660
  %v1020 = vadd.f32 %v990, %v660
  %v1021 = vadd.f32 %v993, %v660
  %v1022 = vadd.f32 %v996, %v660
  %v1023 = vadd.f32 %v999, %v660
  %v1024 = vadd.f32 %v1002, %v660
  %v1025 = vadd.f32 %v1005, %v660
  %v1026 = vadd.f32 %v1008, %v660
  %v1027 = vadd.f32 %v1011, %v660
  %v1028 = vxor.u32 %v1012, 2147483648
  %v1029 = vxor.u32 %v1013, 2147483648
  %v1030 = vxor.u32 %v1014, 2147483648
  %v1031 = vxor.u32 %v1015, 2147483648
  %v1032 = vxor.u32 %v1016, 2147483648
  %v1033 = vxor.u32 %v1017, 2147483648
  %v1034 = vxor.u32 %v1018, 2147483648
  %v1035 = vxor.u32 %v1019, 2147483648
  %v1036 = vxor.u32 %v1020, 2147483648
  %v1037 = vxor.u32 %v1021, 2147483648
  %v1038 = vxor.u32 %v1022, 2147483648
  %v1039 = vxor.u32 %v1023, 2147483648
  %v1040 = vxor.u32 %v1024, 2147483648
  %v1041 = vxor.u32 %v1025, 2147483648
  %v1042 = vxor.u32 %v1026, 2147483648
  %v1043 = vxor.u32 %v1027, 2147483648
  %v1044 = vmul.f32 %v1028, 1.442695
  %v1045 = vpow.pop %v1044
  %v1046 = vmul.f32 %v1029, 1.442695
  %v1047 = vpow.pop %v1046
  %v1048 = vmul.f32 %v1030, 1.442695
  %v1049 = vpow.pop %v1048
  %v1050 = vmul.f32 %v1031, 1.442695
  %v1051 = vpow.pop %v1050
  %v1052 = vmul.f32 %v1032, 1.442695
  %v1053 = vpow.pop %v1052
  %v1054 = vmul.f32 %v1033, 1.442695
  %v1055 = vpow.pop %v1054
  %v1056 = vmul.f32 %v1034, 1.442695
  %v1057 = vpow.pop %v1056
  %v1058 = vmul.f32 %v1035, 1.442695
  %v1059 = vpow.pop %v1058
  %v1060 = vmul.f32 %v1036, 1.442695
  %v1061 = vpow.pop %v1060
  %v1062 = vmul.f32 %v1037, 1.442695
  %v1063 = vpow.pop %v1062
  %v1064 = vmul.f32 %v1038, 1.442695
  %v1065 = vpow.pop %v1064
  %v1066 = vmul.f32 %v1039, 1.442695
  %v1067 = vpow.pop %v1066
  %v1068 = vmul.f32 %v1040, 1.442695
  %v1069 = vpow.pop %v1068
  %v1070 = vmul.f32 %v1041, 1.442695
  %v1071 = vpow.pop %v1070
  %v1072 = vmul.f32 %v1042, 1.442695
  %v1073 = vpow.pop %v1072
  %v1074 = vmul.f32 %v1043, 1.442695
  %v1075 = vpow.pop %v1074
  %v1076 = vadd.f32 %v1045, 1.0
  %v1077 = vadd.f32 %v1047, 1.0
  %v1078 = vadd.f32 %v1049, 1.0
  %v1079 = vadd.f32 %v1051, 1.0
  %v1080 = vadd.f32 %v1053, 1.0
  %v1081 = vadd.f32 %v1055, 1.0
  %v1082 = vadd.f32 %v1057, 1.0
  %v1083 = vadd.f32 %v1059, 1.0
  %v1084 = vadd.f32 %v1061, 1.0
  %v1085 = vadd.f32 %v1063, 1.0
  %v1086 = vadd.f32 %v1065, 1.0
  %v1087 = vadd.f32 %v1067, 1.0
  %v1088 = vadd.f32 %v1069, 1.0
  %v1089 = vadd.f32 %v1071, 1.0
  %v1090 = vadd.f32 %v1073, 1.0
  %v1091 = vadd.f32 %v1075, 1.0
  %v1092 = vrcp.pop %v1076
  %v1093 = vmul.f32 1.0, %v1092
  %v1094 = vrcp.pop %v1077
  %v1095 = vmul.f32 1.0, %v1094
  %v1096 = vrcp.pop %v1078
  %v1097 = vmul.f32 1.0, %v1096
  %v1098 = vrcp.pop %v1079
  %v1099 = vmul.f32 1.0, %v1098
  %v1100 = vrcp.pop %v1080
  %v1101 = vmul.f32 1.0, %v1100
  %v1102 = vrcp.pop %v1081
  %v1103 = vmul.f32 1.0, %v1102
  %v1104 = vrcp.pop %v1082
  %v1105 = vmul.f32 1.0, %v1104
  %v1106 = vrcp.pop %v1083
  %v1107 = vmul.f32 1.0, %v1106
  %v1108 = vrcp.pop %v1084
  %v1109 = vmul.f32 1.0, %v1108
  %v1110 = vrcp.pop %v1085
  %v1111 = vmul.f32 1.0, %v1110
  %v1112 = vrcp.pop %v1086
  %v1113 = vmul.f32 1.0, %v1112
  %v1114 = vrcp.pop %v1087
  %v1115 = vmul.f32 1.0, %v1114
  %v1116 = vrcp.pop %v1088
  %v1117 = vmul.f32 1.0, %v1116
  %v1118 = vrcp.pop %v1089
  %v1119 = vmul.f32 1.0, %v1118
  %v1120 = vrcp.pop %v1090
  %v1121 = vmul.f32 1.0, %v1120
  %v1122 = vrcp.pop %v1091
  %v1123 = vmul.f32 1.0, %v1122
  %1125 = vset.pattern.permute.xlu0 0
  %1126 = vperm.xlu0 %1125, %v1093
  %v1127 = vpop.permute.xlu0 %1126
  %1130 = vset.pattern.permute.xlu0 0
  %1131 = vperm.xlu0 %1130, %v1095
  %v1132 = vpop.permute.xlu0 %1131
  %1135 = vset.pattern.permute.xlu0 0
  %1136 = vperm.xlu0 %1135, %v1097
  %v1137 = vpop.permute.xlu0 %1136
  %1140 = vset.pattern.permute.xlu0 0
  %1141 = vperm.xlu0 %1140, %v1099
  %v1142 = vpop.permute.xlu0 %1141
  %1145 = vset.pattern.permute.xlu0 0
  %1146 = vperm.xlu0 %1145, %v1101
  %v1147 = vpop.permute.xlu0 %1146
  %1150 = vset.pattern.permute.xlu0 0
  %1151 = vperm.xlu0 %1150, %v1103
  %v1152 = vpop.permute.xlu0 %1151
  %1155 = vset.pattern.permute.xlu0 0
  %1156 = vperm.xlu0 %1155, %v1105
  %v1157 = vpop.permute.xlu0 %1156
  %1160 = vset.pattern.permute.xlu0 0
  %1161 = vperm.xlu0 %1160, %v1107
  %v1162 = vpop.permute.xlu0 %1161
  %1165 = vset.pattern.permute.xlu0 0
  %1166 = vperm.xlu0 %1165, %v1109
  %v1167 = vpop.permute.xlu0 %1166
  %1170 = vset.pattern.permute.xlu0 0
  %1171 = vperm.xlu0 %1170, %v1111
  %v1172 = vpop.permute.xlu0 %1171
  %1175 = vset.pattern.permute.xlu0 0
  %1176 = vperm.xlu0 %1175, %v1113
  %v1177 = vpop.permute.xlu0 %1176
  %1180 = vset.pattern.permute.xlu0 0
  %1181 = vperm.xlu0 %1180, %v1115
  %v1182 = vpop.permute.xlu0 %1181
  %1185 = vset.pattern.permute.xlu0 0
  %1186 = vperm.xlu0 %1185, %v1117
  %v1187 = vpop.permute.xlu0 %1186
  %1190 = vset.pattern.permute.xlu0 0
  %1191 = vperm.xlu0 %1190, %v1119
  %v1192 = vpop.permute.xlu0 %1191
  %1195 = vset.pattern.permute.xlu0 0
  %1196 = vperm.xlu0 %1195, %v1121
  %v1197 = vpop.permute.xlu0 %1196
  %1200 = vset.pattern.permute.xlu0 0
  %1201 = vperm.xlu0 %1200, %v1123
  %v1202 = vpop.permute.xlu0 %1201
  %v1204 = vmul.f32 %v1127, %v859
  %v1205 = vmul.f32 %v1132, %v859
  %v1206 = vmul.f32 %v1137, %v859
  %v1207 = vmul.f32 %v1142, %v859
  %v1208 = vmul.f32 %v1147, %v859
  %v1209 = vmul.f32 %v1152, %v859
  %v1210 = vmul.f32 %v1157, %v859
  %v1211 = vmul.f32 %v1162, %v859
  %v1212 = vmul.f32 %v1167, %v859
  %v1213 = vmul.f32 %v1172, %v859
  %v1214 = vmul.f32 %v1177, %v859
  %v1215 = vmul.f32 %v1182, %v859
  %v1216 = vmul.f32 %v1187, %v859
  %v1217 = vmul.f32 %v1192, %v859
  %v1218 = vmul.f32 %v1197, %v859
  %v1219 = vmul.f32 %v1202, %v859
  %v1220 = vadd.f32 %v1204, %v882
  %v1221 = vadd.f32 %v1205, %v882
  %v1222 = vadd.f32 %v1206, %v882
  %v1223 = vadd.f32 %v1207, %v882
  %v1224 = vadd.f32 %v1208, %v882
  %v1225 = vadd.f32 %v1209, %v882
  %v1226 = vadd.f32 %v1210, %v882
  %v1227 = vadd.f32 %v1211, %v882
  %v1228 = vadd.f32 %v1212, %v882
  %v1229 = vadd.f32 %v1213, %v882
  %v1230 = vadd.f32 %v1214, %v882
  %v1231 = vadd.f32 %v1215, %v882
  %v1232 = vadd.f32 %v1216, %v882
  %v1233 = vadd.f32 %v1217, %v882
  %v1234 = vadd.f32 %v1218, %v882
  %v1235 = vadd.f32 %v1219, %v882
  %1236 = vrot.lane.b32.xlu0 %v590, 124
  %v1237 = vpop.permute.xlu0 %1236
  %1238 = vrot.lane.b32.xlu0 %v591, 124
  %v1239 = vpop.permute.xlu0 %1238
  %1240 = vrot.lane.b32.xlu0 %v592, 124
  %v1241 = vpop.permute.xlu0 %1240
  %1242 = vrot.lane.b32.xlu0 %v593, 124
  %v1243 = vpop.permute.xlu0 %1242
  %1244 = vrot.lane.b32.xlu0 %v594, 124
  %v1245 = vpop.permute.xlu0 %1244
  %1246 = vrot.lane.b32.xlu0 %v595, 124
  %v1247 = vpop.permute.xlu0 %1246
  %1248 = vrot.lane.b32.xlu0 %v596, 124
  %v1249 = vpop.permute.xlu0 %1248
  %1250 = vrot.lane.b32.xlu0 %v597, 124
  %v1251 = vpop.permute.xlu0 %1250
  %1252 = vrot.lane.b32.xlu0 %v598, 124
  %v1253 = vpop.permute.xlu0 %1252
  %1254 = vrot.lane.b32.xlu0 %v599, 124
  %v1255 = vpop.permute.xlu0 %1254
  %1256 = vrot.lane.b32.xlu0 %v600, 124
  %v1257 = vpop.permute.xlu0 %1256
  %1258 = vrot.lane.b32.xlu0 %v601, 124
  %v1259 = vpop.permute.xlu0 %1258
  %1260 = vrot.lane.b32.xlu0 %v602, 124
  %v1261 = vpop.permute.xlu0 %1260
  %1262 = vrot.lane.b32.xlu0 %v603, 124
  %v1263 = vpop.permute.xlu0 %1262
  %1264 = vrot.lane.b32.xlu0 %v604, 124
  %v1265 = vpop.permute.xlu0 %1264
  %1266 = vrot.lane.b32.xlu0 %v605, 124
  %v1267 = vpop.permute.xlu0 %1266
  %v1284 = vsel %vm606, %v1237, 0.0
  %1285 = vadd.xlane.f32.xlu0 %v1284
  %v1286 = vpop.xlane.xlu0 %1285
  %v1287 = vsel %vm606, %v1239, 0.0
  %1288 = vadd.xlane.f32.xlu0 %v1287
  %v1289 = vpop.xlane.xlu0 %1288
  %v1290 = vsel %vm606, %v1241, 0.0
  %1291 = vadd.xlane.f32.xlu0 %v1290
  %v1292 = vpop.xlane.xlu0 %1291
  %v1293 = vsel %vm606, %v1243, 0.0
  %1294 = vadd.xlane.f32.xlu0 %v1293
  %v1295 = vpop.xlane.xlu0 %1294
  %v1296 = vsel %vm606, %v1245, 0.0
  %1297 = vadd.xlane.f32.xlu0 %v1296
  %v1298 = vpop.xlane.xlu0 %1297
  %v1299 = vsel %vm606, %v1247, 0.0
  %1300 = vadd.xlane.f32.xlu0 %v1299
  %v1301 = vpop.xlane.xlu0 %1300
  %v1302 = vsel %vm606, %v1249, 0.0
  %1303 = vadd.xlane.f32.xlu0 %v1302
  %v1304 = vpop.xlane.xlu0 %1303
  %v1305 = vsel %vm606, %v1251, 0.0
  %1306 = vadd.xlane.f32.xlu0 %v1305
  %v1307 = vpop.xlane.xlu0 %1306
  %v1308 = vsel %vm606, %v1253, 0.0
  %1309 = vadd.xlane.f32.xlu0 %v1308
  %v1310 = vpop.xlane.xlu0 %1309
  %v1311 = vsel %vm606, %v1255, 0.0
  %1312 = vadd.xlane.f32.xlu0 %v1311
  %v1313 = vpop.xlane.xlu0 %1312
  %v1314 = vsel %vm606, %v1257, 0.0
  %1315 = vadd.xlane.f32.xlu0 %v1314
  %v1316 = vpop.xlane.xlu0 %1315
  %v1317 = vsel %vm606, %v1259, 0.0
  %1318 = vadd.xlane.f32.xlu0 %v1317
  %v1319 = vpop.xlane.xlu0 %1318
  %v1320 = vsel %vm606, %v1261, 0.0
  %1321 = vadd.xlane.f32.xlu0 %v1320
  %v1322 = vpop.xlane.xlu0 %1321
  %v1323 = vsel %vm606, %v1263, 0.0
  %1324 = vadd.xlane.f32.xlu0 %v1323
  %v1325 = vpop.xlane.xlu0 %1324
  %v1326 = vsel %vm606, %v1265, 0.0
  %1327 = vadd.xlane.f32.xlu0 %v1326
  %v1328 = vpop.xlane.xlu0 %1327
  %v1329 = vsel %vm606, %v1267, 0.0
  %1330 = vadd.xlane.f32.xlu0 %v1329
  %v1331 = vpop.xlane.xlu0 %1330
  %v1332 = vadd.f32 %v1286, %v660
  %v1333 = vadd.f32 %v1289, %v660
  %v1334 = vadd.f32 %v1292, %v660
  %v1335 = vadd.f32 %v1295, %v660
  %v1336 = vadd.f32 %v1298, %v660
  %v1337 = vadd.f32 %v1301, %v660
  %v1338 = vadd.f32 %v1304, %v660
  %v1339 = vadd.f32 %v1307, %v660
  %v1340 = vadd.f32 %v1310, %v660
  %v1341 = vadd.f32 %v1313, %v660
  %v1342 = vadd.f32 %v1316, %v660
  %v1343 = vadd.f32 %v1319, %v660
  %v1344 = vadd.f32 %v1322, %v660
  %v1345 = vadd.f32 %v1325, %v660
  %v1346 = vadd.f32 %v1328, %v660
  %v1347 = vadd.f32 %v1331, %v660
  %v1348 = vxor.u32 %v1332, 2147483648
  %v1349 = vxor.u32 %v1333, 2147483648
  %v1350 = vxor.u32 %v1334, 2147483648
  %v1351 = vxor.u32 %v1335, 2147483648
  %v1352 = vxor.u32 %v1336, 2147483648
  %v1353 = vxor.u32 %v1337, 2147483648
  %v1354 = vxor.u32 %v1338, 2147483648
  %v1355 = vxor.u32 %v1339, 2147483648
  %v1356 = vxor.u32 %v1340, 2147483648
  %v1357 = vxor.u32 %v1341, 2147483648
  %v1358 = vxor.u32 %v1342, 2147483648
  %v1359 = vxor.u32 %v1343, 2147483648
  %v1360 = vxor.u32 %v1344, 2147483648
  %v1361 = vxor.u32 %v1345, 2147483648
  %v1362 = vxor.u32 %v1346, 2147483648
  %v1363 = vxor.u32 %v1347, 2147483648
  %v1364 = vmul.f32 %v1348, 1.442695
  %v1365 = vpow.pop %v1364
  %v1366 = vmul.f32 %v1349, 1.442695
  %v1367 = vpow.pop %v1366
  %v1368 = vmul.f32 %v1350, 1.442695
  %v1369 = vpow.pop %v1368
  %v1370 = vmul.f32 %v1351, 1.442695
  %v1371 = vpow.pop %v1370
  %v1372 = vmul.f32 %v1352, 1.442695
  %v1373 = vpow.pop %v1372
  %v1374 = vmul.f32 %v1353, 1.442695
  %v1375 = vpow.pop %v1374
  %v1376 = vmul.f32 %v1354, 1.442695
  %v1377 = vpow.pop %v1376
  %v1378 = vmul.f32 %v1355, 1.442695
  %v1379 = vpow.pop %v1378
  %v1380 = vmul.f32 %v1356, 1.442695
  %v1381 = vpow.pop %v1380
  %v1382 = vmul.f32 %v1357, 1.442695
  %v1383 = vpow.pop %v1382
  %v1384 = vmul.f32 %v1358, 1.442695
  %v1385 = vpow.pop %v1384
  %v1386 = vmul.f32 %v1359, 1.442695
  %v1387 = vpow.pop %v1386
  %v1388 = vmul.f32 %v1360, 1.442695
  %v1389 = vpow.pop %v1388
  %v1390 = vmul.f32 %v1361, 1.442695
  %v1391 = vpow.pop %v1390
  %v1392 = vmul.f32 %v1362, 1.442695
  %v1393 = vpow.pop %v1392
  %v1394 = vmul.f32 %v1363, 1.442695
  %v1395 = vpow.pop %v1394
  %v1396 = vadd.f32 %v1365, 1.0
  %v1397 = vadd.f32 %v1367, 1.0
  %v1398 = vadd.f32 %v1369, 1.0
  %v1399 = vadd.f32 %v1371, 1.0
  %v1400 = vadd.f32 %v1373, 1.0
  %v1401 = vadd.f32 %v1375, 1.0
  %v1402 = vadd.f32 %v1377, 1.0
  %v1403 = vadd.f32 %v1379, 1.0
  %v1404 = vadd.f32 %v1381, 1.0
  %v1405 = vadd.f32 %v1383, 1.0
  %v1406 = vadd.f32 %v1385, 1.0
  %v1407 = vadd.f32 %v1387, 1.0
  %v1408 = vadd.f32 %v1389, 1.0
  %v1409 = vadd.f32 %v1391, 1.0
  %v1410 = vadd.f32 %v1393, 1.0
  %v1411 = vadd.f32 %v1395, 1.0
  %v1412 = vrcp.pop %v1396
  %v1413 = vmul.f32 1.0, %v1412
  %v1414 = vrcp.pop %v1397
  %v1415 = vmul.f32 1.0, %v1414
  %v1416 = vrcp.pop %v1398
  %v1417 = vmul.f32 1.0, %v1416
  %v1418 = vrcp.pop %v1399
  %v1419 = vmul.f32 1.0, %v1418
  %v1420 = vrcp.pop %v1400
  %v1421 = vmul.f32 1.0, %v1420
  %v1422 = vrcp.pop %v1401
  %v1423 = vmul.f32 1.0, %v1422
  %v1424 = vrcp.pop %v1402
  %v1425 = vmul.f32 1.0, %v1424
  %v1426 = vrcp.pop %v1403
  %v1427 = vmul.f32 1.0, %v1426
  %v1428 = vrcp.pop %v1404
  %v1429 = vmul.f32 1.0, %v1428
  %v1430 = vrcp.pop %v1405
  %v1431 = vmul.f32 1.0, %v1430
  %v1432 = vrcp.pop %v1406
  %v1433 = vmul.f32 1.0, %v1432
  %v1434 = vrcp.pop %v1407
  %v1435 = vmul.f32 1.0, %v1434
  %v1436 = vrcp.pop %v1408
  %v1437 = vmul.f32 1.0, %v1436
  %v1438 = vrcp.pop %v1409
  %v1439 = vmul.f32 1.0, %v1438
  %v1440 = vrcp.pop %v1410
  %v1441 = vmul.f32 1.0, %v1440
  %v1442 = vrcp.pop %v1411
  %v1443 = vmul.f32 1.0, %v1442
  %1445 = vset.pattern.permute.xlu0 0
  %1446 = vperm.xlu0 %1445, %v1413
  %v1447 = vpop.permute.xlu0 %1446
  %1450 = vset.pattern.permute.xlu0 0
  %1451 = vperm.xlu0 %1450, %v1415
  %v1452 = vpop.permute.xlu0 %1451
  %1455 = vset.pattern.permute.xlu0 0
  %1456 = vperm.xlu0 %1455, %v1417
  %v1457 = vpop.permute.xlu0 %1456
  %1460 = vset.pattern.permute.xlu0 0
  %1461 = vperm.xlu0 %1460, %v1419
  %v1462 = vpop.permute.xlu0 %1461
  %1465 = vset.pattern.permute.xlu0 0
  %1466 = vperm.xlu0 %1465, %v1421
  %v1467 = vpop.permute.xlu0 %1466
  %1470 = vset.pattern.permute.xlu0 0
  %1471 = vperm.xlu0 %1470, %v1423
  %v1472 = vpop.permute.xlu0 %1471
  %1475 = vset.pattern.permute.xlu0 0
  %1476 = vperm.xlu0 %1475, %v1425
  %v1477 = vpop.permute.xlu0 %1476
  %1480 = vset.pattern.permute.xlu0 0
  %1481 = vperm.xlu0 %1480, %v1427
  %v1482 = vpop.permute.xlu0 %1481
  %1485 = vset.pattern.permute.xlu0 0
  %1486 = vperm.xlu0 %1485, %v1429
  %v1487 = vpop.permute.xlu0 %1486
  %1490 = vset.pattern.permute.xlu0 0
  %1491 = vperm.xlu0 %1490, %v1431
  %v1492 = vpop.permute.xlu0 %1491
  %1495 = vset.pattern.permute.xlu0 0
  %1496 = vperm.xlu0 %1495, %v1433
  %v1497 = vpop.permute.xlu0 %1496
  %1500 = vset.pattern.permute.xlu0 0
  %1501 = vperm.xlu0 %1500, %v1435
  %v1502 = vpop.permute.xlu0 %1501
  %1505 = vset.pattern.permute.xlu0 0
  %1506 = vperm.xlu0 %1505, %v1437
  %v1507 = vpop.permute.xlu0 %1506
  %1510 = vset.pattern.permute.xlu0 0
  %1511 = vperm.xlu0 %1510, %v1439
  %v1512 = vpop.permute.xlu0 %1511
  %1515 = vset.pattern.permute.xlu0 0
  %1516 = vperm.xlu0 %1515, %v1441
  %v1517 = vpop.permute.xlu0 %1516
  %1520 = vset.pattern.permute.xlu0 0
  %1521 = vperm.xlu0 %1520, %v1443
  %v1522 = vpop.permute.xlu0 %1521
  %v1524 = vmul.f32 %v1447, %v859
  %v1525 = vmul.f32 %v1452, %v859
  %v1526 = vmul.f32 %v1457, %v859
  %v1527 = vmul.f32 %v1462, %v859
  %v1528 = vmul.f32 %v1467, %v859
  %v1529 = vmul.f32 %v1472, %v859
  %v1530 = vmul.f32 %v1477, %v859
  %v1531 = vmul.f32 %v1482, %v859
  %v1532 = vmul.f32 %v1487, %v859
  %v1533 = vmul.f32 %v1492, %v859
  %v1534 = vmul.f32 %v1497, %v859
  %v1535 = vmul.f32 %v1502, %v859
  %v1536 = vmul.f32 %v1507, %v859
  %v1537 = vmul.f32 %v1512, %v859
  %v1538 = vmul.f32 %v1517, %v859
  %v1539 = vmul.f32 %v1522, %v859
  %v1540 = vadd.f32 %v1524, %v882
  %v1541 = vadd.f32 %v1525, %v882
  %v1542 = vadd.f32 %v1526, %v882
  %v1543 = vadd.f32 %v1527, %v882
  %v1544 = vadd.f32 %v1528, %v882
  %v1545 = vadd.f32 %v1529, %v882
  %v1546 = vadd.f32 %v1530, %v882
  %v1547 = vadd.f32 %v1531, %v882
  %v1548 = vadd.f32 %v1532, %v882
  %v1549 = vadd.f32 %v1533, %v882
  %v1550 = vadd.f32 %v1534, %v882
  %v1551 = vadd.f32 %v1535, %v882
  %v1552 = vadd.f32 %v1536, %v882
  %v1553 = vadd.f32 %v1537, %v882
  %v1554 = vadd.f32 %v1538, %v882
  %v1555 = vadd.f32 %v1539, %v882
  %1556 = vrot.lane.b32.xlu0 %v590, 122
  %v1557 = vpop.permute.xlu0 %1556
  %1558 = vrot.lane.b32.xlu0 %v591, 122
  %v1559 = vpop.permute.xlu0 %1558
  %1560 = vrot.lane.b32.xlu0 %v592, 122
  %v1561 = vpop.permute.xlu0 %1560
  %1562 = vrot.lane.b32.xlu0 %v593, 122
  %v1563 = vpop.permute.xlu0 %1562
  %1564 = vrot.lane.b32.xlu0 %v594, 122
  %v1565 = vpop.permute.xlu0 %1564
  %1566 = vrot.lane.b32.xlu0 %v595, 122
  %v1567 = vpop.permute.xlu0 %1566
  %1568 = vrot.lane.b32.xlu0 %v596, 122
  %v1569 = vpop.permute.xlu0 %1568
  %1570 = vrot.lane.b32.xlu0 %v597, 122
  %v1571 = vpop.permute.xlu0 %1570
  %1572 = vrot.lane.b32.xlu0 %v598, 122
  %v1573 = vpop.permute.xlu0 %1572
  %1574 = vrot.lane.b32.xlu0 %v599, 122
  %v1575 = vpop.permute.xlu0 %1574
  %1576 = vrot.lane.b32.xlu0 %v600, 122
  %v1577 = vpop.permute.xlu0 %1576
  %1578 = vrot.lane.b32.xlu0 %v601, 122
  %v1579 = vpop.permute.xlu0 %1578
  %1580 = vrot.lane.b32.xlu0 %v602, 122
  %v1581 = vpop.permute.xlu0 %1580
  %1582 = vrot.lane.b32.xlu0 %v603, 122
  %v1583 = vpop.permute.xlu0 %1582
  %1584 = vrot.lane.b32.xlu0 %v604, 122
  %v1585 = vpop.permute.xlu0 %1584
  %1586 = vrot.lane.b32.xlu0 %v605, 122
  %v1587 = vpop.permute.xlu0 %1586
  %v1604 = vsel %vm606, %v1557, 0.0
  %1605 = vadd.xlane.f32.xlu0 %v1604
  %v1606 = vpop.xlane.xlu0 %1605
  %v1607 = vsel %vm606, %v1559, 0.0
  %1608 = vadd.xlane.f32.xlu0 %v1607
  %v1609 = vpop.xlane.xlu0 %1608
  %v1610 = vsel %vm606, %v1561, 0.0
  %1611 = vadd.xlane.f32.xlu0 %v1610
  %v1612 = vpop.xlane.xlu0 %1611
  %v1613 = vsel %vm606, %v1563, 0.0
  %1614 = vadd.xlane.f32.xlu0 %v1613
  %v1615 = vpop.xlane.xlu0 %1614
  %v1616 = vsel %vm606, %v1565, 0.0
  %1617 = vadd.xlane.f32.xlu0 %v1616
  %v1618 = vpop.xlane.xlu0 %1617
  %v1619 = vsel %vm606, %v1567, 0.0
  %1620 = vadd.xlane.f32.xlu0 %v1619
  %v1621 = vpop.xlane.xlu0 %1620
  %v1622 = vsel %vm606, %v1569, 0.0
  %1623 = vadd.xlane.f32.xlu0 %v1622
  %v1624 = vpop.xlane.xlu0 %1623
  %v1625 = vsel %vm606, %v1571, 0.0
  %1626 = vadd.xlane.f32.xlu0 %v1625
  %v1627 = vpop.xlane.xlu0 %1626
  %v1628 = vsel %vm606, %v1573, 0.0
  %1629 = vadd.xlane.f32.xlu0 %v1628
  %v1630 = vpop.xlane.xlu0 %1629
  %v1631 = vsel %vm606, %v1575, 0.0
  %1632 = vadd.xlane.f32.xlu0 %v1631
  %v1633 = vpop.xlane.xlu0 %1632
  %v1634 = vsel %vm606, %v1577, 0.0
  %1635 = vadd.xlane.f32.xlu0 %v1634
  %v1636 = vpop.xlane.xlu0 %1635
  %v1637 = vsel %vm606, %v1579, 0.0
  %1638 = vadd.xlane.f32.xlu0 %v1637
  %v1639 = vpop.xlane.xlu0 %1638
  %v1640 = vsel %vm606, %v1581, 0.0
  %1641 = vadd.xlane.f32.xlu0 %v1640
  %v1642 = vpop.xlane.xlu0 %1641
  %v1643 = vsel %vm606, %v1583, 0.0
  %1644 = vadd.xlane.f32.xlu0 %v1643
  %v1645 = vpop.xlane.xlu0 %1644
  %v1646 = vsel %vm606, %v1585, 0.0
  %1647 = vadd.xlane.f32.xlu0 %v1646
  %v1648 = vpop.xlane.xlu0 %1647
  %v1649 = vsel %vm606, %v1587, 0.0
  %1650 = vadd.xlane.f32.xlu0 %v1649
  %v1651 = vpop.xlane.xlu0 %1650
  %v1652 = vadd.f32 %v1606, %v660
  %v1653 = vadd.f32 %v1609, %v660
  %v1654 = vadd.f32 %v1612, %v660
  %v1655 = vadd.f32 %v1615, %v660
  %v1656 = vadd.f32 %v1618, %v660
  %v1657 = vadd.f32 %v1621, %v660
  %v1658 = vadd.f32 %v1624, %v660
  %v1659 = vadd.f32 %v1627, %v660
  %v1660 = vadd.f32 %v1630, %v660
  %v1661 = vadd.f32 %v1633, %v660
  %v1662 = vadd.f32 %v1636, %v660
  %v1663 = vadd.f32 %v1639, %v660
  %v1664 = vadd.f32 %v1642, %v660
  %v1665 = vadd.f32 %v1645, %v660
  %v1666 = vadd.f32 %v1648, %v660
  %v1667 = vadd.f32 %v1651, %v660
  %v1668 = vxor.u32 %v1652, 2147483648
  %v1669 = vxor.u32 %v1653, 2147483648
  %v1670 = vxor.u32 %v1654, 2147483648
  %v1671 = vxor.u32 %v1655, 2147483648
  %v1672 = vxor.u32 %v1656, 2147483648
  %v1673 = vxor.u32 %v1657, 2147483648
  %v1674 = vxor.u32 %v1658, 2147483648
  %v1675 = vxor.u32 %v1659, 2147483648
  %v1676 = vxor.u32 %v1660, 2147483648
  %v1677 = vxor.u32 %v1661, 2147483648
  %v1678 = vxor.u32 %v1662, 2147483648
  %v1679 = vxor.u32 %v1663, 2147483648
  %v1680 = vxor.u32 %v1664, 2147483648
  %v1681 = vxor.u32 %v1665, 2147483648
  %v1682 = vxor.u32 %v1666, 2147483648
  %v1683 = vxor.u32 %v1667, 2147483648
  %v1684 = vmul.f32 %v1668, 1.442695
  %v1685 = vpow.pop %v1684
  %v1686 = vmul.f32 %v1669, 1.442695
  %v1687 = vpow.pop %v1686
  %v1688 = vmul.f32 %v1670, 1.442695
  %v1689 = vpow.pop %v1688
  %v1690 = vmul.f32 %v1671, 1.442695
  %v1691 = vpow.pop %v1690
  %v1692 = vmul.f32 %v1672, 1.442695
  %v1693 = vpow.pop %v1692
  %v1694 = vmul.f32 %v1673, 1.442695
  %v1695 = vpow.pop %v1694
  %v1696 = vmul.f32 %v1674, 1.442695
  %v1697 = vpow.pop %v1696
  %v1698 = vmul.f32 %v1675, 1.442695
  %v1699 = vpow.pop %v1698
  %v1700 = vmul.f32 %v1676, 1.442695
  %v1701 = vpow.pop %v1700
  %v1702 = vmul.f32 %v1677, 1.442695
  %v1703 = vpow.pop %v1702
  %v1704 = vmul.f32 %v1678, 1.442695
  %v1705 = vpow.pop %v1704
  %v1706 = vmul.f32 %v1679, 1.442695
  %v1707 = vpow.pop %v1706
  %v1708 = vmul.f32 %v1680, 1.442695
  %v1709 = vpow.pop %v1708
  %v1710 = vmul.f32 %v1681, 1.442695
  %v1711 = vpow.pop %v1710
  %v1712 = vmul.f32 %v1682, 1.442695
  %v1713 = vpow.pop %v1712
  %v1714 = vmul.f32 %v1683, 1.442695
  %v1715 = vpow.pop %v1714
  %v1716 = vadd.f32 %v1685, 1.0
  %v1717 = vadd.f32 %v1687, 1.0
  %v1718 = vadd.f32 %v1689, 1.0
  %v1719 = vadd.f32 %v1691, 1.0
  %v1720 = vadd.f32 %v1693, 1.0
  %v1721 = vadd.f32 %v1695, 1.0
  %v1722 = vadd.f32 %v1697, 1.0
  %v1723 = vadd.f32 %v1699, 1.0
  %v1724 = vadd.f32 %v1701, 1.0
  %v1725 = vadd.f32 %v1703, 1.0
  %v1726 = vadd.f32 %v1705, 1.0
  %v1727 = vadd.f32 %v1707, 1.0
  %v1728 = vadd.f32 %v1709, 1.0
  %v1729 = vadd.f32 %v1711, 1.0
  %v1730 = vadd.f32 %v1713, 1.0
  %v1731 = vadd.f32 %v1715, 1.0
  %v1732 = vrcp.pop %v1716
  %v1733 = vmul.f32 1.0, %v1732
  %v1734 = vrcp.pop %v1717
  %v1735 = vmul.f32 1.0, %v1734
  %v1736 = vrcp.pop %v1718
  %v1737 = vmul.f32 1.0, %v1736
  %v1738 = vrcp.pop %v1719
  %v1739 = vmul.f32 1.0, %v1738
  %v1740 = vrcp.pop %v1720
  %v1741 = vmul.f32 1.0, %v1740
  %v1742 = vrcp.pop %v1721
  %v1743 = vmul.f32 1.0, %v1742
  %v1744 = vrcp.pop %v1722
  %v1745 = vmul.f32 1.0, %v1744
  %v1746 = vrcp.pop %v1723
  %v1747 = vmul.f32 1.0, %v1746
  %v1748 = vrcp.pop %v1724
  %v1749 = vmul.f32 1.0, %v1748
  %v1750 = vrcp.pop %v1725
  %v1751 = vmul.f32 1.0, %v1750
  %v1752 = vrcp.pop %v1726
  %v1753 = vmul.f32 1.0, %v1752
  %v1754 = vrcp.pop %v1727
  %v1755 = vmul.f32 1.0, %v1754
  %v1756 = vrcp.pop %v1728
  %v1757 = vmul.f32 1.0, %v1756
  %v1758 = vrcp.pop %v1729
  %v1759 = vmul.f32 1.0, %v1758
  %v1760 = vrcp.pop %v1730
  %v1761 = vmul.f32 1.0, %v1760
  %v1762 = vrcp.pop %v1731
  %v1763 = vmul.f32 1.0, %v1762
  %1765 = vset.pattern.permute.xlu0 0
  %1766 = vperm.xlu0 %1765, %v1733
  %v1767 = vpop.permute.xlu0 %1766
  %1770 = vset.pattern.permute.xlu0 0
  %1771 = vperm.xlu0 %1770, %v1735
  %v1772 = vpop.permute.xlu0 %1771
  %1775 = vset.pattern.permute.xlu0 0
  %1776 = vperm.xlu0 %1775, %v1737
  %v1777 = vpop.permute.xlu0 %1776
  %1780 = vset.pattern.permute.xlu0 0
  %1781 = vperm.xlu0 %1780, %v1739
  %v1782 = vpop.permute.xlu0 %1781
  %1785 = vset.pattern.permute.xlu0 0
  %1786 = vperm.xlu0 %1785, %v1741
  %v1787 = vpop.permute.xlu0 %1786
  %1790 = vset.pattern.permute.xlu0 0
  %1791 = vperm.xlu0 %1790, %v1743
  %v1792 = vpop.permute.xlu0 %1791
  %1795 = vset.pattern.permute.xlu0 0
  %1796 = vperm.xlu0 %1795, %v1745
  %v1797 = vpop.permute.xlu0 %1796
  %1800 = vset.pattern.permute.xlu0 0
  %1801 = vperm.xlu0 %1800, %v1747
  %v1802 = vpop.permute.xlu0 %1801
  %1805 = vset.pattern.permute.xlu0 0
  %1806 = vperm.xlu0 %1805, %v1749
  %v1807 = vpop.permute.xlu0 %1806
  %1810 = vset.pattern.permute.xlu0 0
  %1811 = vperm.xlu0 %1810, %v1751
  %v1812 = vpop.permute.xlu0 %1811
  %1815 = vset.pattern.permute.xlu0 0
  %1816 = vperm.xlu0 %1815, %v1753
  %v1817 = vpop.permute.xlu0 %1816
  %1820 = vset.pattern.permute.xlu0 0
  %1821 = vperm.xlu0 %1820, %v1755
  %v1822 = vpop.permute.xlu0 %1821
  %1825 = vset.pattern.permute.xlu0 0
  %1826 = vperm.xlu0 %1825, %v1757
  %v1827 = vpop.permute.xlu0 %1826
  %1830 = vset.pattern.permute.xlu0 0
  %1831 = vperm.xlu0 %1830, %v1759
  %v1832 = vpop.permute.xlu0 %1831
  %1835 = vset.pattern.permute.xlu0 0
  %1836 = vperm.xlu0 %1835, %v1761
  %v1837 = vpop.permute.xlu0 %1836
  %1840 = vset.pattern.permute.xlu0 0
  %1841 = vperm.xlu0 %1840, %v1763
  %v1842 = vpop.permute.xlu0 %1841
  %v1844 = vmul.f32 %v1767, %v859
  %v1845 = vmul.f32 %v1772, %v859
  %v1846 = vmul.f32 %v1777, %v859
  %v1847 = vmul.f32 %v1782, %v859
  %v1848 = vmul.f32 %v1787, %v859
  %v1849 = vmul.f32 %v1792, %v859
  %v1850 = vmul.f32 %v1797, %v859
  %v1851 = vmul.f32 %v1802, %v859
  %v1852 = vmul.f32 %v1807, %v859
  %v1853 = vmul.f32 %v1812, %v859
  %v1854 = vmul.f32 %v1817, %v859
  %v1855 = vmul.f32 %v1822, %v859
  %v1856 = vmul.f32 %v1827, %v859
  %v1857 = vmul.f32 %v1832, %v859
  %v1858 = vmul.f32 %v1837, %v859
  %v1859 = vmul.f32 %v1842, %v859
  %v1860 = vadd.f32 %v1844, %v882
  %v1861 = vadd.f32 %v1845, %v882
  %v1862 = vadd.f32 %v1846, %v882
  %v1863 = vadd.f32 %v1847, %v882
  %v1864 = vadd.f32 %v1848, %v882
  %v1865 = vadd.f32 %v1849, %v882
  %v1866 = vadd.f32 %v1850, %v882
  %v1867 = vadd.f32 %v1851, %v882
  %v1868 = vadd.f32 %v1852, %v882
  %v1869 = vadd.f32 %v1853, %v882
  %v1870 = vadd.f32 %v1854, %v882
  %v1871 = vadd.f32 %v1855, %v882
  %v1872 = vadd.f32 %v1856, %v882
  %v1873 = vadd.f32 %v1857, %v882
  %v1874 = vadd.f32 %v1858, %v882
  %v1875 = vadd.f32 %v1859, %v882
  %1892 = vrot.lane.b32.xlu0 %v1220, 32
  %v1893 = vpop.permute.xlu0 %1892
  %1894 = vrot.lane.b32.xlu0 %v1221, 32
  %v1895 = vpop.permute.xlu0 %1894
  %1896 = vrot.lane.b32.xlu0 %v1222, 32
  %v1897 = vpop.permute.xlu0 %1896
  %1898 = vrot.lane.b32.xlu0 %v1223, 32
  %v1899 = vpop.permute.xlu0 %1898
  %1900 = vrot.lane.b32.xlu0 %v1224, 32
  %v1901 = vpop.permute.xlu0 %1900
  %1902 = vrot.lane.b32.xlu0 %v1225, 32
  %v1903 = vpop.permute.xlu0 %1902
  %1904 = vrot.lane.b32.xlu0 %v1226, 32
  %v1905 = vpop.permute.xlu0 %1904
  %1906 = vrot.lane.b32.xlu0 %v1227, 32
  %v1907 = vpop.permute.xlu0 %1906
  %1908 = vrot.lane.b32.xlu0 %v1228, 32
  %v1909 = vpop.permute.xlu0 %1908
  %1910 = vrot.lane.b32.xlu0 %v1229, 32
  %v1911 = vpop.permute.xlu0 %1910
  %1912 = vrot.lane.b32.xlu0 %v1230, 32
  %v1913 = vpop.permute.xlu0 %1912
  %1914 = vrot.lane.b32.xlu0 %v1231, 32
  %v1915 = vpop.permute.xlu0 %1914
  %1916 = vrot.lane.b32.xlu0 %v1232, 32
  %v1917 = vpop.permute.xlu0 %1916
  %1918 = vrot.lane.b32.xlu0 %v1233, 32
  %v1919 = vpop.permute.xlu0 %1918
  %1920 = vrot.lane.b32.xlu0 %v1234, 32
  %v1921 = vpop.permute.xlu0 %1920
  %1922 = vrot.lane.b32.xlu0 %v1235, 32
  %v1923 = vpop.permute.xlu0 %1922
  %1956 = vrot.lane.b32.xlu0 %v1540, 64
  %v1957 = vpop.permute.xlu0 %1956
  %1958 = vrot.lane.b32.xlu0 %v1541, 64
  %v1959 = vpop.permute.xlu0 %1958
  %1960 = vrot.lane.b32.xlu0 %v1542, 64
  %v1961 = vpop.permute.xlu0 %1960
  %1962 = vrot.lane.b32.xlu0 %v1543, 64
  %v1963 = vpop.permute.xlu0 %1962
  %1964 = vrot.lane.b32.xlu0 %v1544, 64
  %v1965 = vpop.permute.xlu0 %1964
  %1966 = vrot.lane.b32.xlu0 %v1545, 64
  %v1967 = vpop.permute.xlu0 %1966
  %1968 = vrot.lane.b32.xlu0 %v1546, 64
  %v1969 = vpop.permute.xlu0 %1968
  %1970 = vrot.lane.b32.xlu0 %v1547, 64
  %v1971 = vpop.permute.xlu0 %1970
  %1972 = vrot.lane.b32.xlu0 %v1548, 64
  %v1973 = vpop.permute.xlu0 %1972
  %1974 = vrot.lane.b32.xlu0 %v1549, 64
  %v1975 = vpop.permute.xlu0 %1974
  %1976 = vrot.lane.b32.xlu0 %v1550, 64
  %v1977 = vpop.permute.xlu0 %1976
  %1978 = vrot.lane.b32.xlu0 %v1551, 64
  %v1979 = vpop.permute.xlu0 %1978
  %1980 = vrot.lane.b32.xlu0 %v1552, 64
  %v1981 = vpop.permute.xlu0 %1980
  %1982 = vrot.lane.b32.xlu0 %v1553, 64
  %v1983 = vpop.permute.xlu0 %1982
  %1984 = vrot.lane.b32.xlu0 %v1554, 64
  %v1985 = vpop.permute.xlu0 %1984
  %1986 = vrot.lane.b32.xlu0 %v1555, 64
  %v1987 = vpop.permute.xlu0 %1986
  %2020 = vrot.lane.b32.xlu0 %v1860, 96
  %v2021 = vpop.permute.xlu0 %2020
  %2022 = vrot.lane.b32.xlu0 %v1861, 96
  %v2023 = vpop.permute.xlu0 %2022
  %2024 = vrot.lane.b32.xlu0 %v1862, 96
  %v2025 = vpop.permute.xlu0 %2024
  %2026 = vrot.lane.b32.xlu0 %v1863, 96
  %v2027 = vpop.permute.xlu0 %2026
  %2028 = vrot.lane.b32.xlu0 %v1864, 96
  %v2029 = vpop.permute.xlu0 %2028
  %2030 = vrot.lane.b32.xlu0 %v1865, 96
  %v2031 = vpop.permute.xlu0 %2030
  %2032 = vrot.lane.b32.xlu0 %v1866, 96
  %v2033 = vpop.permute.xlu0 %2032
  %2034 = vrot.lane.b32.xlu0 %v1867, 96
  %v2035 = vpop.permute.xlu0 %2034
  %2036 = vrot.lane.b32.xlu0 %v1868, 96
  %v2037 = vpop.permute.xlu0 %2036
  %2038 = vrot.lane.b32.xlu0 %v1869, 96
  %v2039 = vpop.permute.xlu0 %2038
  %2040 = vrot.lane.b32.xlu0 %v1870, 96
  %v2041 = vpop.permute.xlu0 %2040
  %2042 = vrot.lane.b32.xlu0 %v1871, 96
  %v2043 = vpop.permute.xlu0 %2042
  %2044 = vrot.lane.b32.xlu0 %v1872, 96
  %v2045 = vpop.permute.xlu0 %2044
  %2046 = vrot.lane.b32.xlu0 %v1873, 96
  %v2047 = vpop.permute.xlu0 %2046
  %2048 = vrot.lane.b32.xlu0 %v1874, 96
  %v2049 = vpop.permute.xlu0 %2048
  %2050 = vrot.lane.b32.xlu0 %v1875, 96
  %v2051 = vpop.permute.xlu0 %2050
  %vm2068 = vcmask 261120
  %v2069 = vsel %vm2068, %v884, %v1893
  %v2070 = vsel %vm2068, %v885, %v1895
  %v2071 = vsel %vm2068, %v886, %v1897
  %v2072 = vsel %vm2068, %v887, %v1899
  %v2073 = vsel %vm2068, %v888, %v1901
  %v2074 = vsel %vm2068, %v889, %v1903
  %v2075 = vsel %vm2068, %v890, %v1905
  %v2076 = vsel %vm2068, %v891, %v1907
  %v2077 = vsel %vm2068, %v892, %v1909
  %v2078 = vsel %vm2068, %v893, %v1911
  %v2079 = vsel %vm2068, %v894, %v1913
  %v2080 = vsel %vm2068, %v895, %v1915
  %v2081 = vsel %vm2068, %v896, %v1917
  %v2082 = vsel %vm2068, %v897, %v1919
  %v2083 = vsel %vm2068, %v898, %v1921
  %v2084 = vsel %vm2068, %v899, %v1923
  %vm2085 = vcmask 523264
  %v2086 = vsel %vm2085, %v2069, %v1957
  %v2087 = vsel %vm2085, %v2070, %v1959
  %v2088 = vsel %vm2085, %v2071, %v1961
  %v2089 = vsel %vm2085, %v2072, %v1963
  %v2090 = vsel %vm2085, %v2073, %v1965
  %v2091 = vsel %vm2085, %v2074, %v1967
  %v2092 = vsel %vm2085, %v2075, %v1969
  %v2093 = vsel %vm2085, %v2076, %v1971
  %v2094 = vsel %vm2085, %v2077, %v1973
  %v2095 = vsel %vm2085, %v2078, %v1975
  %v2096 = vsel %vm2085, %v2079, %v1977
  %v2097 = vsel %vm2085, %v2080, %v1979
  %v2098 = vsel %vm2085, %v2081, %v1981
  %v2099 = vsel %vm2085, %v2082, %v1983
  %v2100 = vsel %vm2085, %v2083, %v1985
  %v2101 = vsel %vm2085, %v2084, %v1987
  %vm2102 = vcmask 785408
  %v2103 = vsel %vm2102, %v2086, %v2021
  %v2104 = vsel %vm2102, %v2087, %v2023
  %v2105 = vsel %vm2102, %v2088, %v2025
  %v2106 = vsel %vm2102, %v2089, %v2027
  %v2107 = vsel %vm2102, %v2090, %v2029
  %v2108 = vsel %vm2102, %v2091, %v2031
  %v2109 = vsel %vm2102, %v2092, %v2033
  %v2110 = vsel %vm2102, %v2093, %v2035
  %v2111 = vsel %vm2102, %v2094, %v2037
  %v2112 = vsel %vm2102, %v2095, %v2039
  %v2113 = vsel %vm2102, %v2096, %v2041
  %v2114 = vsel %vm2102, %v2097, %v2043
  %v2115 = vsel %vm2102, %v2098, %v2045
  %v2116 = vsel %vm2102, %v2099, %v2047
  %v2117 = vsel %vm2102, %v2100, %v2049
  %v2118 = vsel %vm2102, %v2101, %v2051
  %v2119 = vmul.f32 %v2103, %v505
  %v2120 = vmul.f32 %v2104, %v510
  %v2121 = vmul.f32 %v2105, %v515
  %v2122 = vmul.f32 %v2106, %v520
  %v2123 = vmul.f32 %v2107, %v525
  %v2124 = vmul.f32 %v2108, %v530
  %v2125 = vmul.f32 %v2109, %v535
  %v2126 = vmul.f32 %v2110, %v540
  %v2127 = vmul.f32 %v2111, %v545
  %v2128 = vmul.f32 %v2112, %v550
  %v2129 = vmul.f32 %v2113, %v555
  %v2130 = vmul.f32 %v2114, %v560
  %v2131 = vmul.f32 %v2115, %v565
  %v2132 = vmul.f32 %v2116, %v570
  %v2133 = vmul.f32 %v2117, %v575
  %v2134 = vmul.f32 %v2118, %v580
  %2135 = vst [vmem:[%s9] sm:$0xff] %v2119
  %2136 = vst [vmem:[%s9 + $0x8] sm:$0xff] %v2120
  %2137 = vst [vmem:[%s9 + $0x10] sm:$0xff] %v2121
  %2138 = vst [vmem:[%s9 + $0x18] sm:$0xff] %v2122
  %2139 = vst [vmem:[%s9 + $0x20] sm:$0xff] %v2123
  %2140 = vst [vmem:[%s9 + $0x28] sm:$0xff] %v2124
  %2141 = vst [vmem:[%s9 + $0x30] sm:$0xff] %v2125
  %2142 = vst [vmem:[%s9 + $0x38] sm:$0xff] %v2126
  %2143 = vst [vmem:[%s9 + $0x40] sm:$0xff] %v2127
  %2144 = vst [vmem:[%s9 + $0x48] sm:$0xff] %v2128
  %2145 = vst [vmem:[%s9 + $0x50] sm:$0xff] %v2129
  %2146 = vst [vmem:[%s9 + $0x58] sm:$0xff] %v2130
  %2147 = vst [vmem:[%s9 + $0x60] sm:$0xff] %v2131
  %2148 = vst [vmem:[%s9 + $0x68] sm:$0xff] %v2132
  %2149 = vst [vmem:[%s9 + $0x70] sm:$0xff] %v2133
  %2150 = vst [vmem:[%s9 + $0x78] sm:$0xff] %v2134
  // Predicated region
  $region38: #{sab_pallas_nhwc.1} parent=0 // pred_check
    _
  $region39: #{sab_pallas_nhwc.1} parent=0 // pred_check_branch
    %2152 = sbr.rel (0) target = $region41
  $region40: #{sab_pallas_nhwc.1} parent=0 // pred_region
    _
  $region41: #{sab_pallas_nhwc.1} parent=0 // pred_fallthru
    _
  // Predicated region
  $region42: #{sab_pallas_nhwc.1} parent=0 // pred_check
    _
  $region43: #{sab_pallas_nhwc.1} parent=0 // pred_check_branch
    %2154 = sbr.rel (0) target = $region45
  $region44: #{sab_pallas_nhwc.1} parent=0 // pred_region
    _
  $region45: #{sab_pallas_nhwc.1} parent=0 // pred_fallthru
    _

</llo_original>
